<compile_context>
chip_gen: v7x
topology: tpu7x:2x2x1
jax: 0.10.0
libtpu: 0.0.40
codegen_flags: <defaults>
</compile_context>

<pallas_src>
import math

import jax
import jax.numpy as jnp
from jax.experimental import pallas as pl
from jax.experimental.pallas import tpu as pltpu


_BN_EPS = 1e-5


def _round_up(x, m):
    return ((x + m - 1) // m) * m


# ----------------------------------------------------------------------------
# Fused BlockUnet kernel
# ----------------------------------------------------------------------------
def _make_block_unet_kernel(N, H, W, CP):
    HW = H * W
    NHW = N * HW
    inv_n = 1.0 / float(NHW)

    # 3x3 taps: tap[p] = src[p + dy*W + dx]  ==  roll(src, (-(dy*W+dx)) % NHW)
    # (jnp.roll semantics: out[i] = in[i - shift]).
    taps = []
    for k in range(9):
        ky, kx = divmod(k, 3)
        dy, dx = ky - 1, kx - 1
        taps.append((k, dy, dx, (-(dy * W + dx)) % NHW))

    def kernel(x_ref, w1_ref, b1_ref, g1_ref, be1_ref,
               w2_ref, b2_ref, g2_ref, be2_ref,
               o_ref, col_ref):
        # Border masks: hoisted + pre-broadcast ONCE to (CP, NHW); kept in bf16
        # and applied after the down-cast so the selects run at half width.
        p = jax.lax.broadcasted_iota(jnp.int32, (CP, NHW), 1)
        q = p % HW                      # within-image flat index
        r = p % W                       # column index
        top_m = jnp.where(q >= W, 1.0, 0.0).astype(jnp.bfloat16)      # row above exists
        bot_m = jnp.where(q < HW - W, 1.0, 0.0).astype(jnp.bfloat16)  # row below exists
        lft_m = jnp.where(r != 0, 1.0, 0.0).astype(jnp.bfloat16)      # col left  exists
        rgt_m = jnp.where(r != W - 1, 1.0, 0.0).astype(jnp.bfloat16)  # col right exists

        def conv_relu_bn(src, w_ref, b_ref, g_ref, be_ref):
            # --- im2col: 8 static lane rolls (XLU) + 1 cast + <=2 bf16 mask
            #     multiplies per tap; every col store is tile aligned
            #     (16-sublane row block, full NHW lanes) -> unmasked vst. ---
            for k, dy, dx, shift in taps:
                t = src if shift == 0 else pltpu.roll(src, shift, 1)
                t = t.astype(jnp.bfloat16)
                if dy == -1:
                    t = t * top_m
                elif dy == 1:
                    t = t * bot_m
                if dx == -1:
                    t = t * lft_m
                elif dx == 1:
                    t = t * rgt_m
                col_ref[k * CP:(k + 1) * CP, :] = t
            # --- one MXU matmul per conv: K = 9*CP, bf16 in / f32 accumulate ---
            h = jnp.dot(w_ref[...], col_ref[...],
                        preferred_element_type=jnp.float32)      # (M, NHW)
            h = jnp.maximum(h + b_ref[...], 0.0)                 # bias + ReLU
            # --- training-mode BatchNorm (biased variance), two-pass stats ---
            mean = jnp.sum(h, axis=1, keepdims=True) * inv_n
            d = h - mean
            var = jnp.sum(d * d, axis=1, keepdims=True) * inv_n
            scale = g_ref[...] * jax.lax.rsqrt(var + _BN_EPS)
            return d * scale + be_ref[...]                       # (M, NHW) f32

        # conv1 params are row-padded to CP, so bn1's output is already a
        # (CP, NHW) slab (padded rows exactly zero) and feeds conv2 directly:
        # no staging copy, no scratch zeroing.
        h1 = conv_relu_bn(x_ref[...].astype(jnp.float32),
                          w1_ref, b1_ref, g1_ref, be1_ref)
        o_ref[...] = conv_relu_bn(h1, w2_ref, b2_ref, g2_ref, be2_ref)

    return kernel


# ----------------------------------------------------------------------------
# Wrapper around pallas_call
# ----------------------------------------------------------------------------
def block_unet_forward(x_nchw, params):
    """BlockUnet forward: NCHW f32 in -> NCHW f32 out (training-mode BN)."""
    N, Cin, H, W = x_nchw.shape
    Cout = params["w1"].shape[0]
    CP = _round_up(max(Cin, Cout), 16)          # bf16 sublane tile
    HW, NHW = H * W, N * H * W

    # ---- one-time layout glue: lane-dense (C, N*H*W), channels padded to CP.
    #      Keep this layout across chained blocks in a real network.
    x_lane = jnp.transpose(x_nchw, (1, 0, 2, 3)).reshape(Cin, NHW)
    x_lane = jnp.pad(x_lane, ((0, CP - Cin), (0, 0))).astype(jnp.bfloat16)

    def prep_w(w, rows):      # (Co, Ci, 3, 3) -> (rows, 9*CP), col index k*CP+c
        co, ci = w.shape[0], w.shape[1]
        wt = jnp.transpose(w, (0, 2, 3, 1))                      # (Co, 3, 3, Ci)
        wt = jnp.pad(wt, ((0, rows - co), (0, 0), (0, 0), (0, CP - ci)))
        return wt.reshape(rows, 9 * CP).astype(jnp.bfloat16)

    def prep_v(v, rows):
        v = v.reshape(-1, 1).astype(jnp.float32)
        return jnp.pad(v, ((0, rows - v.shape[0]), (0, 0)))

    # conv1 is row-padded to CP with zero weights/bias/gamma/beta -> its BN
    # output's padded rows are exactly zero (var=0 -> scale=0 -> out=beta=0).
    w1 = prep_w(params["w1"], CP)
    b1, g1, be1 = (prep_v(params[k], CP) for k in ("b1", "g1", "beta1"))
    w2 = prep_w(params["w2"], Cout)
    b2, g2, be2 = (prep_v(params[k], Cout) for k in ("b2", "g2", "beta2"))

    kernel = _make_block_unet_kernel(N, H, W, CP)

    def full(shape):
        return pl.BlockSpec(shape, lambda i: (0,) * len(shape))

    out = pl.pallas_call(
        kernel,
        out_shape=jax.ShapeDtypeStruct((Cout, NHW), jnp.float32),
        grid=(1,),
        in_specs=[
            full((CP, NHW)),
            full((CP, 9 * CP)), full((CP, 1)), full((CP, 1)), full((CP, 1)),
            full((Cout, 9 * CP)), full((Cout, 1)), full((Cout, 1)), full((Cout, 1)),
        ],
        out_specs=full((Cout, NHW)),
        scratch_shapes=[
            pltpu.VMEM((9 * CP, NHW), jnp.bfloat16),    # im2col slab
        ],
        compiler_params=pltpu.CompilerParams(
            dimension_semantics=("arbitrary",)),
    )(x_lane, w1, b1, g1, be1, w2, b2, g2, be2)

    return jnp.transpose(out.reshape(Cout, N, H, W), (1, 0, 2, 3))   # -> NCHW


# ----------------------------------------------------------------------------
# Parameter init (mirrors the PyTorch __init__) and a pure-JAX reference
# ----------------------------------------------------------------------------
def init_block_params(key, in_ch, out_ch):
    k1, kb1, k2, kb2 = jax.random.split(key, 4)
    fan1 = in_ch * 9
    w1 = math.sqrt(2.0 / fan1) * jax.random.normal(k1, (out_ch, in_ch, 3, 3), jnp.float32)
    b1 = jax.random.uniform(kb1, (out_ch,), jnp.float32,
                            -1.0 / math.sqrt(fan1), 1.0 / math.sqrt(fan1))
    fan2 = out_ch * 9
    w2 = math.sqrt(2.0 / fan2) * jax.random.normal(k2, (out_ch, out_ch, 3, 3), jnp.float32)
    b2 = jax.random.uniform(kb2, (out_ch,), jnp.float32,
                            -1.0 / math.sqrt(fan2), 1.0 / math.sqrt(fan2))
    ones = jnp.ones((out_ch,), jnp.float32)
    zeros = jnp.zeros((out_ch,), jnp.float32)
    return dict(w1=w1, b1=b1, g1=ones, beta1=zeros,
                w2=w2, b2=b2, g2=ones, beta2=zeros)


def block_unet_reference(x, p):
    """Pure-JAX f32 reference (tolerance check against the bf16 kernel)."""
    def conv(x, w, b):
        y = jax.lax.conv_general_dilated(
            x, w, window_strides=(1, 1), padding=((1, 1), (1, 1)),
            dimension_numbers=("NCHW", "OIHW", "NCHW"))
        return y + b[None, :, None, None]

    def bn(x, g, be):
        mean = jnp.mean(x, axis=(0, 2, 3), keepdims=True)
        var = jnp.mean((x - mean) ** 2, axis=(0, 2, 3), keepdims=True)
        return ((x - mean) * jax.lax.rsqrt(var + _BN_EPS)
                * g[None, :, None, None] + be[None, :, None, None])

    h = jnp.maximum(conv(x, p["w1"], p["b1"]), 0.0)
    h = bn(h, p["g1"], p["beta1"])
    h = jnp.maximum(conv(h, p["w2"], p["b2"]), 0.0)
    return bn(h, p["g2"], p["beta2"])


# ----------------------------------------------------------------------------
if __name__ == "__main__":
    N, Cin, Cout, H, W = 2, 4, 8, 16, 16

    root = jax.random.PRNGKey(0)
    kx, kp = jax.random.split(root)
    x = jax.random.normal(kx, (N, Cin, H, W), jnp.float32)
    params = init_block_params(kp, Cin, Cout)

    out = block_unet_forward(x, params)
    jax.block_until_ready(out)

    assert out.shape == (N, Cout, H, W), out.shape
    assert out.dtype == jnp.float32

    ref = block_unet_reference(x, params)
    abs_err = float(jnp.max(jnp.abs(out - ref)))
    rmse = float(jnp.sqrt(jnp.mean((out - ref) ** 2)))
    assert abs_err < 0.15, f"max abs error vs f32 reference too large: {abs_err}"
    assert rmse < 0.03, f"rmse vs f32 reference too large: {rmse}"

    print("KERNEL_OK")
</pallas_src>

<mosaic_0001>
module attributes {stable_mosaic.version = 11 : i64} {
  func.func @kernel(%arg0: i32, %arg1: memref<16x512xbf16, #tpu.memory_space<vmem>>, %arg2: memref<16x144xbf16, #tpu.memory_space<vmem>>, %arg3: memref<16x1xf32, #tpu.memory_space<vmem>>, %arg4: memref<16x1xf32, #tpu.memory_space<vmem>>, %arg5: memref<16x1xf32, #tpu.memory_space<vmem>>, %arg6: memref<8x144xbf16, #tpu.memory_space<vmem>>, %arg7: memref<8x1xf32, #tpu.memory_space<vmem>>, %arg8: memref<8x1xf32, #tpu.memory_space<vmem>>, %arg9: memref<8x1xf32, #tpu.memory_space<vmem>>, %arg10: memref<8x512xf32, #tpu.memory_space<vmem>>, %arg11: memref<144x512xbf16, #tpu.memory_space<vmem>>) attributes {dimension_semantics = [#tpu.dimension_semantics<arbitrary>], iteration_bounds = array<i64: 1>, scalar_prefetch = 0 : i64, scratch_operands = 1 : i64, tpu.core_type = #tpu.core_type<tc>, window_params = [{pipeline_mode = #tpu.pipeline_mode<synchronous>, transform_indices = @transform_0, window_bounds = array<i64: 16, 512>}, {pipeline_mode = #tpu.pipeline_mode<synchronous>, transform_indices = @transform_1, window_bounds = array<i64: 16, 144>}, {pipeline_mode = #tpu.pipeline_mode<synchronous>, transform_indices = @transform_2, window_bounds = array<i64: 16, 1>}, {pipeline_mode = #tpu.pipeline_mode<synchronous>, transform_indices = @transform_3, window_bounds = array<i64: 16, 1>}, {pipeline_mode = #tpu.pipeline_mode<synchronous>, transform_indices = @transform_4, window_bounds = array<i64: 16, 1>}, {pipeline_mode = #tpu.pipeline_mode<synchronous>, transform_indices = @transform_5, window_bounds = array<i64: 8, 144>}, {pipeline_mode = #tpu.pipeline_mode<synchronous>, transform_indices = @transform_6, window_bounds = array<i64: 8, 1>}, {pipeline_mode = #tpu.pipeline_mode<synchronous>, transform_indices = @transform_7, window_bounds = array<i64: 8, 1>}, {pipeline_mode = #tpu.pipeline_mode<synchronous>, transform_indices = @transform_8, window_bounds = array<i64: 8, 1>}, {pipeline_mode = #tpu.pipeline_mode<synchronous>, transform_indices = @transform_9, window_bounds = array<i64: 8, 512>}]} {
    %0 = tpu.iota {dimensions = array<i32: 1>} : vector<16x512xi32>
    %c256_i32 = arith.constant 256 : i32
    %c0_i32 = arith.constant 0 : i32
    %1 = arith.cmpi eq, %c256_i32, %c0_i32 : i32
    %c1_i32 = arith.constant 1 : i32
    %2 = arith.select %1, %c1_i32, %c256_i32 : i32
    %3 = vector.broadcast %2 : i32 to vector<16x512xi32>
    %4 = arith.remsi %0, %3 : vector<16x512xi32>
    %c0_i32_0 = arith.constant 0 : i32
    %5 = vector.broadcast %c0_i32_0 : i32 to vector<16x512xi32>
    %6 = arith.cmpi ne, %4, %5 : vector<16x512xi32>
    %c0_i32_1 = arith.constant 0 : i32
    %7 = vector.broadcast %c0_i32_1 : i32 to vector<16x512xi32>
    %8 = arith.cmpi slt, %4, %7 : vector<16x512xi32>
    %c0_i32_2 = arith.constant 0 : i32
    %9 = arith.cmpi slt, %2, %c0_i32_2 : i32
    %10 = vector.broadcast %9 : i1 to vector<16x512xi1>
    %11 = vector.broadcast %10 : vector<16x512xi1> to vector<16x512xi1>
    %12 = arith.xori %8, %11 : vector<16x512xi1>
    %13 = arith.andi %12, %6 : vector<16x512xi1>
    %14 = vector.broadcast %2 : i32 to vector<16x512xi32>
    %15 = arith.addi %4, %14 : vector<16x512xi32>
    %16 = arith.select %13, %15, %4 : vector<16x512xi1>, vector<16x512xi32>
    %c16_i32 = arith.constant 16 : i32
    %c0_i32_3 = arith.constant 0 : i32
    %17 = arith.cmpi eq, %c16_i32, %c0_i32_3 : i32
    %c1_i32_4 = arith.constant 1 : i32
    %18 = arith.select %17, %c1_i32_4, %c16_i32 : i32
    %19 = vector.broadcast %18 : i32 to vector<16x512xi32>
    %20 = arith.remsi %0, %19 : vector<16x512xi32>
    %c0_i32_5 = arith.constant 0 : i32
    %21 = vector.broadcast %c0_i32_5 : i32 to vector<16x512xi32>
    %22 = arith.cmpi ne, %20, %21 : vector<16x512xi32>
    %c0_i32_6 = arith.constant 0 : i32
    %23 = vector.broadcast %c0_i32_6 : i32 to vector<16x512xi32>
    %24 = arith.cmpi slt, %20, %23 : vector<16x512xi32>
    %c0_i32_7 = arith.constant 0 : i32
    %25 = arith.cmpi slt, %18, %c0_i32_7 : i32
    %26 = vector.broadcast %25 : i1 to vector<16x512xi1>
    %27 = vector.broadcast %26 : vector<16x512xi1> to vector<16x512xi1>
    %28 = arith.xori %24, %27 : vector<16x512xi1>
    %29 = arith.andi %28, %22 : vector<16x512xi1>
    %30 = vector.broadcast %18 : i32 to vector<16x512xi32>
    %31 = arith.addi %20, %30 : vector<16x512xi32>
    %32 = arith.select %29, %31, %20 : vector<16x512xi1>, vector<16x512xi32>
    %c16_i32_8 = arith.constant 16 : i32
    %33 = vector.broadcast %c16_i32_8 : i32 to vector<16x512xi32>
    %34 = arith.cmpi sge, %16, %33 : vector<16x512xi32>
    %cst = arith.constant 1.000000e+00 : f32
    %cst_9 = arith.constant 0.000000e+00 : f32
    %35 = vector.broadcast %cst : f32 to vector<16x512xf32>
    %36 = vector.broadcast %cst_9 : f32 to vector<16x512xf32>
    %37 = arith.select %34, %35, %36 : vector<16x512xi1>, vector<16x512xf32>
    %38 = arith.truncf %37 : vector<16x512xf32> to vector<16x512xbf16>
    %c240_i32 = arith.constant 240 : i32
    %39 = vector.broadcast %c240_i32 : i32 to vector<16x512xi32>
    %40 = arith.cmpi slt, %16, %39 : vector<16x512xi32>
    %cst_10 = arith.constant 1.000000e+00 : f32
    %cst_11 = arith.constant 0.000000e+00 : f32
    %41 = vector.broadcast %cst_10 : f32 to vector<16x512xf32>
    %42 = vector.broadcast %cst_11 : f32 to vector<16x512xf32>
    %43 = arith.select %40, %41, %42 : vector<16x512xi1>, vector<16x512xf32>
    %44 = arith.truncf %43 : vector<16x512xf32> to vector<16x512xbf16>
    %c0_i32_12 = arith.constant 0 : i32
    %45 = vector.broadcast %c0_i32_12 : i32 to vector<16x512xi32>
    %46 = arith.cmpi ne, %32, %45 : vector<16x512xi32>
    %cst_13 = arith.constant 1.000000e+00 : f32
    %cst_14 = arith.constant 0.000000e+00 : f32
    %47 = vector.broadcast %cst_13 : f32 to vector<16x512xf32>
    %48 = vector.broadcast %cst_14 : f32 to vector<16x512xf32>
    %49 = arith.select %46, %47, %48 : vector<16x512xi1>, vector<16x512xf32>
    %50 = arith.truncf %49 : vector<16x512xf32> to vector<16x512xbf16>
    %c15_i32 = arith.constant 15 : i32
    %51 = vector.broadcast %c15_i32 : i32 to vector<16x512xi32>
    %52 = arith.cmpi ne, %32, %51 : vector<16x512xi32>
    %cst_15 = arith.constant 1.000000e+00 : f32
    %cst_16 = arith.constant 0.000000e+00 : f32
    %53 = vector.broadcast %cst_15 : f32 to vector<16x512xf32>
    %54 = vector.broadcast %cst_16 : f32 to vector<16x512xf32>
    %55 = arith.select %52, %53, %54 : vector<16x512xi1>, vector<16x512xf32>
    %56 = arith.truncf %55 : vector<16x512xf32> to vector<16x512xbf16>
    %c0 = arith.constant 0 : index
    %c0_17 = arith.constant 0 : index
    %57 = vector.load %arg1[%c0, %c0_17] : memref<16x512xbf16, #tpu.memory_space<vmem>>, vector<16x512xbf16>
    %58 = arith.extf %57 : vector<16x512xbf16> to vector<16x512xf32>
    %c17_i32 = arith.constant 17 : i32
    %59 = tpu.dynamic_rotate %58 by %c17_i32 dim 1 : vector<16x512xf32>, i32 -> vector<16x512xf32>
    %60 = arith.truncf %59 : vector<16x512xf32> to vector<16x512xbf16>
    %61 = arith.mulf %60, %38 : vector<16x512xbf16>
    %62 = arith.mulf %61, %50 : vector<16x512xbf16>
    %c0_18 = arith.constant 0 : index
    %c0_19 = arith.constant 0 : index
    %63 = vector.load %arg11[%c0_18, %c0_19] : memref<144x512xbf16, #tpu.memory_space<vmem>>, vector<16x512xbf16>
    tpu.vector_store %arg11[%c0_18, %c0_19], %62 {strides = array<i32>} : memref<144x512xbf16, #tpu.memory_space<vmem>>, vector<16x512xbf16>,
    %c16_i32_20 = arith.constant 16 : i32
    %64 = tpu.dynamic_rotate %58 by %c16_i32_20 dim 1 : vector<16x512xf32>, i32 -> vector<16x512xf32>
    %65 = arith.truncf %64 : vector<16x512xf32> to vector<16x512xbf16>
    %66 = arith.mulf %65, %38 : vector<16x512xbf16>
    %c16 = arith.constant 16 : index
    %c0_21 = arith.constant 0 : index
    %67 = vector.load %arg11[%c16, %c0_21] : memref<144x512xbf16, #tpu.memory_space<vmem>>, vector<16x512xbf16>
    tpu.vector_store %arg11[%c16, %c0_21], %66 {strides = array<i32>} : memref<144x512xbf16, #tpu.memory_space<vmem>>, vector<16x512xbf16>,
    %c15_i32_22 = arith.constant 15 : i32
    %68 = tpu.dynamic_rotate %58 by %c15_i32_22 dim 1 : vector<16x512xf32>, i32 -> vector<16x512xf32>
    %69 = arith.truncf %68 : vector<16x512xf32> to vector<16x512xbf16>
    %70 = arith.mulf %69, %38 : vector<16x512xbf16>
    %71 = arith.mulf %70, %56 : vector<16x512xbf16>
    %c32 = arith.constant 32 : index
    %c0_23 = arith.constant 0 : index
    %72 = vector.load %arg11[%c32, %c0_23] : memref<144x512xbf16, #tpu.memory_space<vmem>>, vector<16x512xbf16>
    tpu.vector_store %arg11[%c32, %c0_23], %71 {strides = array<i32>} : memref<144x512xbf16, #tpu.memory_space<vmem>>, vector<16x512xbf16>,
    %c1_i32_24 = arith.constant 1 : i32
    %73 = tpu.dynamic_rotate %58 by %c1_i32_24 dim 1 : vector<16x512xf32>, i32 -> vector<16x512xf32>
    %74 = arith.truncf %73 : vector<16x512xf32> to vector<16x512xbf16>
    %75 = arith.mulf %74, %50 : vector<16x512xbf16>
    %c48 = arith.constant 48 : index
    %c0_25 = arith.constant 0 : index
    %76 = vector.load %arg11[%c48, %c0_25] : memref<144x512xbf16, #tpu.memory_space<vmem>>, vector<16x512xbf16>
    tpu.vector_store %arg11[%c48, %c0_25], %75 {strides = array<i32>} : memref<144x512xbf16, #tpu.memory_space<vmem>>, vector<16x512xbf16>,
    %77 = arith.truncf %58 : vector<16x512xf32> to vector<16x512xbf16>
    %c64 = arith.constant 64 : index
    %c0_26 = arith.constant 0 : index
    %78 = vector.load %arg11[%c64, %c0_26] : memref<144x512xbf16, #tpu.memory_space<vmem>>, vector<16x512xbf16>
    tpu.vector_store %arg11[%c64, %c0_26], %77 {strides = array<i32>} : memref<144x512xbf16, #tpu.memory_space<vmem>>, vector<16x512xbf16>,
    %c511_i32 = arith.constant 511 : i32
    %79 = tpu.dynamic_rotate %58 by %c511_i32 dim 1 : vector<16x512xf32>, i32 -> vector<16x512xf32>
    %80 = arith.truncf %79 : vector<16x512xf32> to vector<16x512xbf16>
    %81 = arith.mulf %80, %56 : vector<16x512xbf16>
    %c80 = arith.constant 80 : index
    %c0_27 = arith.constant 0 : index
    %82 = vector.load %arg11[%c80, %c0_27] : memref<144x512xbf16, #tpu.memory_space<vmem>>, vector<16x512xbf16>
    tpu.vector_store %arg11[%c80, %c0_27], %81 {strides = array<i32>} : memref<144x512xbf16, #tpu.memory_space<vmem>>, vector<16x512xbf16>,
    %c497_i32 = arith.constant 497 : i32
    %83 = tpu.dynamic_rotate %58 by %c497_i32 dim 1 : vector<16x512xf32>, i32 -> vector<16x512xf32>
    %84 = arith.truncf %83 : vector<16x512xf32> to vector<16x512xbf16>
    %85 = arith.mulf %84, %44 : vector<16x512xbf16>
    %86 = arith.mulf %85, %50 : vector<16x512xbf16>
    %c96 = arith.constant 96 : index
    %c0_28 = arith.constant 0 : index
    %87 = vector.load %arg11[%c96, %c0_28] : memref<144x512xbf16, #tpu.memory_space<vmem>>, vector<16x512xbf16>
    tpu.vector_store %arg11[%c96, %c0_28], %86 {strides = array<i32>} : memref<144x512xbf16, #tpu.memory_space<vmem>>, vector<16x512xbf16>,
    %c496_i32 = arith.constant 496 : i32
    %88 = tpu.dynamic_rotate %58 by %c496_i32 dim 1 : vector<16x512xf32>, i32 -> vector<16x512xf32>
    %89 = arith.truncf %88 : vector<16x512xf32> to vector<16x512xbf16>
    %90 = arith.mulf %89, %44 : vector<16x512xbf16>
    %c112 = arith.constant 112 : index
    %c0_29 = arith.constant 0 : index
    %91 = vector.load %arg11[%c112, %c0_29] : memref<144x512xbf16, #tpu.memory_space<vmem>>, vector<16x512xbf16>
    tpu.vector_store %arg11[%c112, %c0_29], %90 {strides = array<i32>} : memref<144x512xbf16, #tpu.memory_space<vmem>>, vector<16x512xbf16>,
    %c495_i32 = arith.constant 495 : i32
    %92 = tpu.dynamic_rotate %58 by %c495_i32 dim 1 : vector<16x512xf32>, i32 -> vector<16x512xf32>
    %93 = arith.truncf %92 : vector<16x512xf32> to vector<16x512xbf16>
    %94 = arith.mulf %93, %44 : vector<16x512xbf16>
    %95 = arith.mulf %94, %56 : vector<16x512xbf16>
    %c128 = arith.constant 128 : index
    %c0_30 = arith.constant 0 : index
    %96 = vector.load %arg11[%c128, %c0_30] : memref<144x512xbf16, #tpu.memory_space<vmem>>, vector<16x512xbf16>
    tpu.vector_store %arg11[%c128, %c0_30], %95 {strides = array<i32>} : memref<144x512xbf16, #tpu.memory_space<vmem>>, vector<16x512xbf16>,
    %c0_31 = arith.constant 0 : index
    %c0_32 = arith.constant 0 : index
    %97 = vector.load %arg2[%c0_31, %c0_32] : memref<16x144xbf16, #tpu.memory_space<vmem>>, vector<16x144xbf16>
    %c0_33 = arith.constant 0 : index
    %c0_34 = arith.constant 0 : index
    %98 = vector.load %arg11[%c0_33, %c0_34] : memref<144x512xbf16, #tpu.memory_space<vmem>>, vector<144x512xbf16>
    %cst_35 = arith.constant dense<0.000000e+00> : vector<16x512xf32>
    %99 = tpu.matmul %97, %98, %cst_35 {dimension_numbers = #tpu.dot_dimension_numbers<[1], [0], [0], [1], [0, 0, 1, 1], [], []>} : vector<16x144xbf16>, vector<144x512xbf16>, vector<16x512xf32> -> vector<16x512xf32>
    %c0_36 = arith.constant 0 : index
    %c0_37 = arith.constant 0 : index
    %100 = vector.load %arg3[%c0_36, %c0_37] : memref<16x1xf32, #tpu.memory_space<vmem>>, vector<16x1xf32>
    %101 = vector.broadcast %100 : vector<16x1xf32> to vector<16x512xf32>
    %102 = arith.addf %99, %101 : vector<16x512xf32>
    %cst_38 = arith.constant 0.000000e+00 : f32
    %103 = vector.broadcast %cst_38 : f32 to vector<16x512xf32>
    %104 = arith.maximumf %102, %103 : vector<16x512xf32>
    %cst_39 = arith.constant dense<0.000000e+00> : vector<16xf32>
    %105 = vector.multi_reduction <add>, %104, %cst_39 [1] : vector<16x512xf32> to vector<16xf32>
    %106 = vector.shape_cast %105 : vector<16xf32> to vector<16x1xf32>
    %cst_40 = arith.constant 0.001953125 : f32
    %107 = vector.broadcast %cst_40 : f32 to vector<16x1xf32>
    %108 = arith.mulf %106, %107 : vector<16x1xf32>
    %109 = vector.broadcast %108 : vector<16x1xf32> to vector<16x512xf32>
    %110 = arith.subf %104, %109 : vector<16x512xf32>
    %111 = arith.mulf %110, %110 : vector<16x512xf32>
    %cst_41 = arith.constant dense<0.000000e+00> : vector<16xf32>
    %112 = vector.multi_reduction <add>, %111, %cst_41 [1] : vector<16x512xf32> to vector<16xf32>
    %113 = vector.shape_cast %112 : vector<16xf32> to vector<16x1xf32>
    %cst_42 = arith.constant 0.001953125 : f32
    %114 = vector.broadcast %cst_42 : f32 to vector<16x1xf32>
    %115 = arith.mulf %113, %114 : vector<16x1xf32>
    %c0_43 = arith.constant 0 : index
    %c0_44 = arith.constant 0 : index
    %116 = vector.load %arg4[%c0_43, %c0_44] : memref<16x1xf32, #tpu.memory_space<vmem>>, vector<16x1xf32>
    %cst_45 = arith.constant 9.99999974E-6 : f32
    %117 = vector.broadcast %cst_45 : f32 to vector<16x1xf32>
    %118 = arith.addf %115, %117 : vector<16x1xf32>
    %119 = math.rsqrt %118 : vector<16x1xf32>
    %120 = arith.mulf %116, %119 : vector<16x1xf32>
    %121 = vector.broadcast %120 : vector<16x1xf32> to vector<16x512xf32>
    %122 = arith.mulf %110, %121 : vector<16x512xf32>
    %c0_46 = arith.constant 0 : index
    %c0_47 = arith.constant 0 : index
    %123 = vector.load %arg5[%c0_46, %c0_47] : memref<16x1xf32, #tpu.memory_space<vmem>>, vector<16x1xf32>
    %124 = vector.broadcast %123 : vector<16x1xf32> to vector<16x512xf32>
    %125 = arith.addf %122, %124 : vector<16x512xf32>
    %c17_i32_48 = arith.constant 17 : i32
    %126 = tpu.dynamic_rotate %125 by %c17_i32_48 dim 1 : vector<16x512xf32>, i32 -> vector<16x512xf32>
    %127 = arith.truncf %126 : vector<16x512xf32> to vector<16x512xbf16>
    %128 = arith.mulf %127, %38 : vector<16x512xbf16>
    %129 = arith.mulf %128, %50 : vector<16x512xbf16>
    %c0_49 = arith.constant 0 : index
    %c0_50 = arith.constant 0 : index
    %130 = vector.load %arg11[%c0_49, %c0_50] : memref<144x512xbf16, #tpu.memory_space<vmem>>, vector<16x512xbf16>
    tpu.vector_store %arg11[%c0_49, %c0_50], %129 {strides = array<i32>} : memref<144x512xbf16, #tpu.memory_space<vmem>>, vector<16x512xbf16>,
    %c16_i32_51 = arith.constant 16 : i32
    %131 = tpu.dynamic_rotate %125 by %c16_i32_51 dim 1 : vector<16x512xf32>, i32 -> vector<16x512xf32>
    %132 = arith.truncf %131 : vector<16x512xf32> to vector<16x512xbf16>
    %133 = arith.mulf %132, %38 : vector<16x512xbf16>
    %c16_52 = arith.constant 16 : index
    %c0_53 = arith.constant 0 : index
    %134 = vector.load %arg11[%c16_52, %c0_53] : memref<144x512xbf16, #tpu.memory_space<vmem>>, vector<16x512xbf16>
    tpu.vector_store %arg11[%c16_52, %c0_53], %133 {strides = array<i32>} : memref<144x512xbf16, #tpu.memory_space<vmem>>, vector<16x512xbf16>,
    %c15_i32_54 = arith.constant 15 : i32
    %135 = tpu.dynamic_rotate %125 by %c15_i32_54 dim 1 : vector<16x512xf32>, i32 -> vector<16x512xf32>
    %136 = arith.truncf %135 : vector<16x512xf32> to vector<16x512xbf16>
    %137 = arith.mulf %136, %38 : vector<16x512xbf16>
    %138 = arith.mulf %137, %56 : vector<16x512xbf16>
    %c32_55 = arith.constant 32 : index
    %c0_56 = arith.constant 0 : index
    %139 = vector.load %arg11[%c32_55, %c0_56] : memref<144x512xbf16, #tpu.memory_space<vmem>>, vector<16x512xbf16>
    tpu.vector_store %arg11[%c32_55, %c0_56], %138 {strides = array<i32>} : memref<144x512xbf16, #tpu.memory_space<vmem>>, vector<16x512xbf16>,
    %c1_i32_57 = arith.constant 1 : i32
    %140 = tpu.dynamic_rotate %125 by %c1_i32_57 dim 1 : vector<16x512xf32>, i32 -> vector<16x512xf32>
    %141 = arith.truncf %140 : vector<16x512xf32> to vector<16x512xbf16>
    %142 = arith.mulf %141, %50 : vector<16x512xbf16>
    %c48_58 = arith.constant 48 : index
    %c0_59 = arith.constant 0 : index
    %143 = vector.load %arg11[%c48_58, %c0_59] : memref<144x512xbf16, #tpu.memory_space<vmem>>, vector<16x512xbf16>
    tpu.vector_store %arg11[%c48_58, %c0_59], %142 {strides = array<i32>} : memref<144x512xbf16, #tpu.memory_space<vmem>>, vector<16x512xbf16>,
    %144 = arith.truncf %125 : vector<16x512xf32> to vector<16x512xbf16>
    %c64_60 = arith.constant 64 : index
    %c0_61 = arith.constant 0 : index
    %145 = vector.load %arg11[%c64_60, %c0_61] : memref<144x512xbf16, #tpu.memory_space<vmem>>, vector<16x512xbf16>
    tpu.vector_store %arg11[%c64_60, %c0_61], %144 {strides = array<i32>} : memref<144x512xbf16, #tpu.memory_space<vmem>>, vector<16x512xbf16>,
    %c511_i32_62 = arith.constant 511 : i32
    %146 = tpu.dynamic_rotate %125 by %c511_i32_62 dim 1 : vector<16x512xf32>, i32 -> vector<16x512xf32>
    %147 = arith.truncf %146 : vector<16x512xf32> to vector<16x512xbf16>
    %148 = arith.mulf %147, %56 : vector<16x512xbf16>
    %c80_63 = arith.constant 80 : index
    %c0_64 = arith.constant 0 : index
    %149 = vector.load %arg11[%c80_63, %c0_64] : memref<144x512xbf16, #tpu.memory_space<vmem>>, vector<16x512xbf16>
    tpu.vector_store %arg11[%c80_63, %c0_64], %148 {strides = array<i32>} : memref<144x512xbf16, #tpu.memory_space<vmem>>, vector<16x512xbf16>,
    %c497_i32_65 = arith.constant 497 : i32
    %150 = tpu.dynamic_rotate %125 by %c497_i32_65 dim 1 : vector<16x512xf32>, i32 -> vector<16x512xf32>
    %151 = arith.truncf %150 : vector<16x512xf32> to vector<16x512xbf16>
    %152 = arith.mulf %151, %44 : vector<16x512xbf16>
    %153 = arith.mulf %152, %50 : vector<16x512xbf16>
    %c96_66 = arith.constant 96 : index
    %c0_67 = arith.constant 0 : index
    %154 = vector.load %arg11[%c96_66, %c0_67] : memref<144x512xbf16, #tpu.memory_space<vmem>>, vector<16x512xbf16>
    tpu.vector_store %arg11[%c96_66, %c0_67], %153 {strides = array<i32>} : memref<144x512xbf16, #tpu.memory_space<vmem>>, vector<16x512xbf16>,
    %c496_i32_68 = arith.constant 496 : i32
    %155 = tpu.dynamic_rotate %125 by %c496_i32_68 dim 1 : vector<16x512xf32>, i32 -> vector<16x512xf32>
    %156 = arith.truncf %155 : vector<16x512xf32> to vector<16x512xbf16>
    %157 = arith.mulf %156, %44 : vector<16x512xbf16>
    %c112_69 = arith.constant 112 : index
    %c0_70 = arith.constant 0 : index
    %158 = vector.load %arg11[%c112_69, %c0_70] : memref<144x512xbf16, #tpu.memory_space<vmem>>, vector<16x512xbf16>
    tpu.vector_store %arg11[%c112_69, %c0_70], %157 {strides = array<i32>} : memref<144x512xbf16, #tpu.memory_space<vmem>>, vector<16x512xbf16>,
    %c495_i32_71 = arith.constant 495 : i32
    %159 = tpu.dynamic_rotate %125 by %c495_i32_71 dim 1 : vector<16x512xf32>, i32 -> vector<16x512xf32>
    %160 = arith.truncf %159 : vector<16x512xf32> to vector<16x512xbf16>
    %161 = arith.mulf %160, %44 : vector<16x512xbf16>
    %162 = arith.mulf %161, %56 : vector<16x512xbf16>
    %c128_72 = arith.constant 128 : index
    %c0_73 = arith.constant 0 : index
    %163 = vector.load %arg11[%c128_72, %c0_73] : memref<144x512xbf16, #tpu.memory_space<vmem>>, vector<16x512xbf16>
    tpu.vector_store %arg11[%c128_72, %c0_73], %162 {strides = array<i32>} : memref<144x512xbf16, #tpu.memory_space<vmem>>, vector<16x512xbf16>,
    %c0_74 = arith.constant 0 : index
    %c0_75 = arith.constant 0 : index
    %164 = vector.load %arg6[%c0_74, %c0_75] : memref<8x144xbf16, #tpu.memory_space<vmem>>, vector<8x144xbf16>
    %c0_76 = arith.constant 0 : index
    %c0_77 = arith.constant 0 : index
    %165 = vector.load %arg11[%c0_76, %c0_77] : memref<144x512xbf16, #tpu.memory_space<vmem>>, vector<144x512xbf16>
    %cst_78 = arith.constant dense<0.000000e+00> : vector<8x512xf32>
    %166 = tpu.matmul %164, %165, %cst_78 {dimension_numbers = #tpu.dot_dimension_numbers<[1], [0], [0], [1], [0, 0, 1, 1], [], []>} : vector<8x144xbf16>, vector<144x512xbf16>, vector<8x512xf32> -> vector<8x512xf32>
    %c0_79 = arith.constant 0 : index
    %c0_80 = arith.constant 0 : index
    %167 = vector.load %arg7[%c0_79, %c0_80] : memref<8x1xf32, #tpu.memory_space<vmem>>, vector<8x1xf32>
    %168 = vector.broadcast %167 : vector<8x1xf32> to vector<8x512xf32>
    %169 = arith.addf %166, %168 : vector<8x512xf32>
    %cst_81 = arith.constant 0.000000e+00 : f32
    %170 = vector.broadcast %cst_81 : f32 to vector<8x512xf32>
    %171 = arith.maximumf %169, %170 : vector<8x512xf32>
    %cst_82 = arith.constant dense<0.000000e+00> : vector<8xf32>
    %172 = vector.multi_reduction <add>, %171, %cst_82 [1] : vector<8x512xf32> to vector<8xf32>
    %173 = vector.shape_cast %172 : vector<8xf32> to vector<8x1xf32>
    %cst_83 = arith.constant 0.001953125 : f32
    %174 = vector.broadcast %cst_83 : f32 to vector<8x1xf32>
    %175 = arith.mulf %173, %174 : vector<8x1xf32>
    %176 = vector.broadcast %175 : vector<8x1xf32> to vector<8x512xf32>
    %177 = arith.subf %171, %176 : vector<8x512xf32>
    %178 = arith.mulf %177, %177 : vector<8x512xf32>
    %cst_84 = arith.constant dense<0.000000e+00> : vector<8xf32>
    %179 = vector.multi_reduction <add>, %178, %cst_84 [1] : vector<8x512xf32> to vector<8xf32>
    %180 = vector.shape_cast %179 : vector<8xf32> to vector<8x1xf32>
    %cst_85 = arith.constant 0.001953125 : f32
    %181 = vector.broadcast %cst_85 : f32 to vector<8x1xf32>
    %182 = arith.mulf %180, %181 : vector<8x1xf32>
    %c0_86 = arith.constant 0 : index
    %c0_87 = arith.constant 0 : index
    %183 = vector.load %arg8[%c0_86, %c0_87] : memref<8x1xf32, #tpu.memory_space<vmem>>, vector<8x1xf32>
    %cst_88 = arith.constant 9.99999974E-6 : f32
    %184 = vector.broadcast %cst_88 : f32 to vector<8x1xf32>
    %185 = arith.addf %182, %184 : vector<8x1xf32>
    %186 = math.rsqrt %185 : vector<8x1xf32>
    %187 = arith.mulf %183, %186 : vector<8x1xf32>
    %188 = vector.broadcast %187 : vector<8x1xf32> to vector<8x512xf32>
    %189 = arith.mulf %177, %188 : vector<8x512xf32>
    %c0_89 = arith.constant 0 : index
    %c0_90 = arith.constant 0 : index
    %190 = vector.load %arg9[%c0_89, %c0_90] : memref<8x1xf32, #tpu.memory_space<vmem>>, vector<8x1xf32>
    %191 = vector.broadcast %190 : vector<8x1xf32> to vector<8x512xf32>
    %192 = arith.addf %189, %191 : vector<8x512xf32>
    %c0_91 = arith.constant 0 : index
    %c0_92 = arith.constant 0 : index
    %193 = vector.load %arg10[%c0_91, %c0_92] : memref<8x512xf32, #tpu.memory_space<vmem>>, vector<8x512xf32>
    tpu.vector_store %arg10[%c0_91, %c0_92], %192 {strides = array<i32>} : memref<8x512xf32, #tpu.memory_space<vmem>>, vector<8x512xf32>,
    return
  }
  func.func @transform_0(%arg0: i32) -> (i32, i32) {
    %c0_i32 = arith.constant 0 : i32
    %c0_i32_0 = arith.constant 0 : i32
    %c0_i32_1 = arith.constant 0 : i32
    return %c0_i32, %c0_i32_0 : i32, i32
  }
  func.func @transform_1(%arg0: i32) -> (i32, i32) {
    %c0_i32 = arith.constant 0 : i32
    %c0_i32_0 = arith.constant 0 : i32
    %c0_i32_1 = arith.constant 0 : i32
    return %c0_i32, %c0_i32_0 : i32, i32
  }
  func.func @transform_2(%arg0: i32) -> (i32, i32) {
    %c0_i32 = arith.constant 0 : i32
    %c0_i32_0 = arith.constant 0 : i32
    %c0_i32_1 = arith.constant 0 : i32
    return %c0_i32, %c0_i32_0 : i32, i32
  }
  func.func @transform_3(%arg0: i32) -> (i32, i32) {
    %c0_i32 = arith.constant 0 : i32
    %c0_i32_0 = arith.constant 0 : i32
    %c0_i32_1 = arith.constant 0 : i32
    return %c0_i32, %c0_i32_0 : i32, i32
  }
  func.func @transform_4(%arg0: i32) -> (i32, i32) {
    %c0_i32 = arith.constant 0 : i32
    %c0_i32_0 = arith.constant 0 : i32
    %c0_i32_1 = arith.constant 0 : i32
    return %c0_i32, %c0_i32_0 : i32, i32
  }
  func.func @transform_5(%arg0: i32) -> (i32, i32) {
    %c0_i32 = arith.constant 0 : i32
    %c0_i32_0 = arith.constant 0 : i32
    %c0_i32_1 = arith.constant 0 : i32
    return %c0_i32, %c0_i32_0 : i32, i32
  }
  func.func @transform_6(%arg0: i32) -> (i32, i32) {
    %c0_i32 = arith.constant 0 : i32
    %c0_i32_0 = arith.constant 0 : i32
    %c0_i32_1 = arith.constant 0 : i32
    return %c0_i32, %c0_i32_0 : i32, i32
  }
  func.func @transform_7(%arg0: i32) -> (i32, i32) {
    %c0_i32 = arith.constant 0 : i32
    %c0_i32_0 = arith.constant 0 : i32
    %c0_i32_1 = arith.constant 0 : i32
    return %c0_i32, %c0_i32_0 : i32, i32
  }
  func.func @transform_8(%arg0: i32) -> (i32, i32) {
    %c0_i32 = arith.constant 0 : i32
    %c0_i32_0 = arith.constant 0 : i32
    %c0_i32_1 = arith.constant 0 : i32
    return %c0_i32, %c0_i32_0 : i32, i32
  }
  func.func @transform_9(%arg0: i32) -> (i32, i32) {
    %c0_i32 = arith.constant 0 : i32
    %c0_i32_0 = arith.constant 0 : i32
    %c0_i32_1 = arith.constant 0 : i32
    return %c0_i32, %c0_i32_0 : i32, i32
  }
}

</mosaic_0001>

<llo_original>
// kernel: tpu_custom_call.1
$region0: #{tpu_custom_call.1}
  #allocation0 [shape = 'u32[]', space=smem, size = 0x4, offset = 0x4, fixed_abs, tag = 'smem constant byte address 0x4 - core index']
  #allocation1 [shape = 'u32[144,128]{1,0:T(1,128)}', space=vmem, size = 0x12000, scoped, tag = 'internal scratch']
  #allocation2 [shape = 'bf16[144,512]{1,0:T(16,128)(2,1)}', space=vmem, size = 0x24000, scoped, tag = 'scratch operand']
  %s0 = inlined_call_operand.vmem [shape: bf16[16,512], index: 0, kind: input, shape index: {}]
  %s1 = inlined_call_operand.vmem [shape: bf16[16,144], index: 1, kind: input, shape index: {}]
  %s2 = inlined_call_operand.vmem [shape: f32[16,1], index: 2, kind: input, shape index: {}]
  %s3 = inlined_call_operand.vmem [shape: f32[16,1], index: 3, kind: input, shape index: {}]
  %s4 = inlined_call_operand.vmem [shape: f32[16,1], index: 4, kind: input, shape index: {}]
  %s5 = inlined_call_operand.vmem [shape: bf16[8,144], index: 5, kind: input, shape index: {}]
  %s6 = inlined_call_operand.vmem [shape: f32[8,1], index: 6, kind: input, shape index: {}]
  %s7 = inlined_call_operand.vmem [shape: f32[8,1], index: 7, kind: input, shape index: {}]
  %s8 = inlined_call_operand.vmem [shape: f32[8,1], index: 8, kind: input, shape index: {}]
  %s9 = inlined_call_operand.hbm [shape: f32[8,512], index: 9, kind: output, shape index: {}]
  %s10 = sld [smem:[#allocation0]]
  $region46: #{tpu_custom_call.1} parent=0
    _
  %s12 = ssub.s32 1, %s10
  %s13 = scalar_select 0, %s12, %s10
  $region1: #{tpu_custom_call.1} parent=0
    #allocation3 [shape = 'u8[16384]{0}', space=vmem, size = 0x4000, scoped, tag = 'output window, operand 0, single buffered']
    #allocation4 [shape = 's32[1]{0}', space=sflag, size = 0x4, scoped, tag = 'scoped memory for tpu_custom_call.1']
    %14 = vsyncpa [#allocation4], 0
    // Predicated region
    $region2: #{tpu_custom_call.1} parent=1 // pred_check
      _
    $region3: #{tpu_custom_call.1} parent=1 // pred_check_branch
      %16 = sbr.rel (0) target = $region5
    $region4: #{tpu_custom_call.1} parent=1 // pred_region
      _
    $region5: #{tpu_custom_call.1} parent=1 // pred_fallthru
      _
    // Predicated region
    $region6: #{tpu_custom_call.1} parent=1 // pred_check
      _
    $region7: #{tpu_custom_call.1} parent=1 // pred_check_branch
      %18 = sbr.rel (0) target = $region9
    $region8: #{tpu_custom_call.1} parent=1 // pred_region
      _
    $region9: #{tpu_custom_call.1} parent=1 // pred_fallthru
      _
    // Predicated region
    $region10: #{tpu_custom_call.1} parent=1 // pred_check
      _
    $region11: #{tpu_custom_call.1} parent=1 // pred_check_branch
      %20 = sbr.rel (0) target = $region13
    $region12: #{tpu_custom_call.1} parent=1 // pred_region
      _
    $region13: #{tpu_custom_call.1} parent=1 // pred_fallthru
      _
    // Predicated region
    $region14: #{tpu_custom_call.1} parent=1 // pred_check
      _
    $region15: #{tpu_custom_call.1} parent=1 // pred_check_branch
      %22 = sbr.rel (0) target = $region17
    $region16: #{tpu_custom_call.1} parent=1 // pred_region
      _
    $region17: #{tpu_custom_call.1} parent=1 // pred_fallthru
      _
    // Predicated region
    $region18: #{tpu_custom_call.1} parent=1 // pred_check
      _
    $region19: #{tpu_custom_call.1} parent=1 // pred_check_branch
      %24 = sbr.rel (0) target = $region21
    $region20: #{tpu_custom_call.1} parent=1 // pred_region
      _
    $region21: #{tpu_custom_call.1} parent=1 // pred_fallthru
      _
    // Predicated region
    $region22: #{tpu_custom_call.1} parent=1 // pred_check
      _
    $region23: #{tpu_custom_call.1} parent=1 // pred_check_branch
      %26 = sbr.rel (0) target = $region25
    $region24: #{tpu_custom_call.1} parent=1 // pred_region
      _
    $region25: #{tpu_custom_call.1} parent=1 // pred_fallthru
      _
    // Predicated region
    $region26: #{tpu_custom_call.1} parent=1 // pred_check
      _
    $region27: #{tpu_custom_call.1} parent=1 // pred_check_branch
      %28 = sbr.rel (0) target = $region29
    $region28: #{tpu_custom_call.1} parent=1 // pred_region
      _
    $region29: #{tpu_custom_call.1} parent=1 // pred_fallthru
      _
    // Predicated region
    $region30: #{tpu_custom_call.1} parent=1 // pred_check
      _
    $region31: #{tpu_custom_call.1} parent=1 // pred_check_branch
      %30 = sbr.rel (0) target = $region33
    $region32: #{tpu_custom_call.1} parent=1 // pred_region
      _
    $region33: #{tpu_custom_call.1} parent=1 // pred_fallthru
      _
    // Predicated region
    $region34: #{tpu_custom_call.1} parent=1 // pred_check
      _
    $region35: #{tpu_custom_call.1} parent=1 // pred_check_branch
      %32 = sbr.rel (0) target = $region37
    $region36: #{tpu_custom_call.1} parent=1 // pred_region
      _
    $region37: #{tpu_custom_call.1} parent=1 // pred_fallthru
      _
    %v34 = vlaneseq
    %v35 = vand.u32 %v34, 127
    %v36 = vadd.s32 %v35, 128
    %v37 = vadd.s32 %v35, 256
    %v38 = vadd.s32 %v35, 384
    %vm39 = vcmp.lt.s32.totalorder %v35, 0
    %v40 = vsub.s32 0, %v35
    %v41 = vsel %vm39, %v40, %v35
    %v42 = vshrl.u32 %v41, 8
    %v43 = vand.u32 %v41, 255
    %v44 = vsub.s32 0, %v43
    %v45 = vsel %vm39, %v44, %v43
    %vm46 = vcmp.lt.s32.totalorder %v36, 0
    %v47 = vsub.s32 0, %v36
    %v48 = vsel %vm46, %v47, %v36
    %v49 = vshrl.u32 %v48, 8
    %v50 = vand.u32 %v48, 255
    %v51 = vsub.s32 0, %v50
    %v52 = vsel %vm46, %v51, %v50
    %vm53 = vcmp.lt.s32.totalorder %v37, 0
    %v54 = vsub.s32 0, %v37
    %v55 = vsel %vm53, %v54, %v37
    %v56 = vshrl.u32 %v55, 8
    %v57 = vand.u32 %v55, 255
    %v58 = vsub.s32 0, %v57
    %v59 = vsel %vm53, %v58, %v57
    %vm60 = vcmp.lt.s32.totalorder %v38, 0
    %v61 = vsub.s32 0, %v38
    %v62 = vsel %vm60, %v61, %v38
    %v63 = vshrl.u32 %v62, 8
    %v64 = vand.u32 %v62, 255
    %v65 = vsub.s32 0, %v64
    %v66 = vsel %vm60, %v65, %v64
    %vm67 = vcmp.ne.s32.totalorder %v45, 0
    %vm68 = vcmp.ne.s32.totalorder %v52, 0
    %vm69 = vcmp.ne.s32.totalorder %v59, 0
    %vm70 = vcmp.ne.s32.totalorder %v66, 0
    %vm71 = vcmp.lt.s32.totalorder %v45, 0
    %vm72 = vcmp.lt.s32.totalorder %v52, 0
    %vm73 = vcmp.lt.s32.totalorder %v59, 0
    %vm74 = vcmp.lt.s32.totalorder %v66, 0
    %vm75 = vmand %vm71, %vm67
    %vm76 = vmand %vm72, %vm68
    %vm77 = vmand %vm73, %vm69
    %vm78 = vmand %vm74, %vm70
    %v79 = vadd.s32 %v45, 256
    %v80 = vadd.s32 %v52, 256
    %v81 = vadd.s32 %v59, 256
    %v82 = vadd.s32 %v66, 256
    %v83 = vsel %vm75, %v79, %v45
    %v84 = vsel %vm76, %v80, %v52
    %v85 = vsel %vm77, %v81, %v59
    %v86 = vsel %vm78, %v82, %v66
    %vm87 = vcmp.lt.s32.totalorder %v35, 0
    %v88 = vsub.s32 0, %v35
    %v89 = vsel %vm87, %v88, %v35
    %v90 = vshrl.u32 %v89, 4
    %v91 = vand.u32 %v89, 15
    %v92 = vsub.s32 0, %v91
    %v93 = vsel %vm87, %v92, %v91
    %vm94 = vcmp.lt.s32.totalorder %v36, 0
    %v95 = vsub.s32 0, %v36
    %v96 = vsel %vm94, %v95, %v36
    %v97 = vshrl.u32 %v96, 4
    %v98 = vand.u32 %v96, 15
    %v99 = vsub.s32 0, %v98
    %v100 = vsel %vm94, %v99, %v98
    %vm101 = vcmp.lt.s32.totalorder %v37, 0
    %v102 = vsub.s32 0, %v37
    %v103 = vsel %vm101, %v102, %v37
    %v104 = vshrl.u32 %v103, 4
    %v105 = vand.u32 %v103, 15
    %v106 = vsub.s32 0, %v105
    %v107 = vsel %vm101, %v106, %v105
    %vm108 = vcmp.lt.s32.totalorder %v38, 0
    %v109 = vsub.s32 0, %v38
    %v110 = vsel %vm108, %v109, %v38
    %v111 = vshrl.u32 %v110, 4
    %v112 = vand.u32 %v110, 15
    %v113 = vsub.s32 0, %v112
    %v114 = vsel %vm108, %v113, %v112
    %vm115 = vcmp.ne.s32.totalorder %v93, 0
    %vm116 = vcmp.ne.s32.totalorder %v100, 0
    %vm117 = vcmp.ne.s32.totalorder %v107, 0
    %vm118 = vcmp.ne.s32.totalorder %v114, 0
    %vm119 = vcmp.lt.s32.totalorder %v93, 0
    %vm120 = vcmp.lt.s32.totalorder %v100, 0
    %vm121 = vcmp.lt.s32.totalorder %v107, 0
    %vm122 = vcmp.lt.s32.totalorder %v114, 0
    %vm123 = vmand %vm119, %vm115
    %vm124 = vmand %vm120, %vm116
    %vm125 = vmand %vm121, %vm117
    %vm126 = vmand %vm122, %vm118
    %v127 = vadd.s32 %v93, 16
    %v128 = vadd.s32 %v100, 16
    %v129 = vadd.s32 %v107, 16
    %v130 = vadd.s32 %v114, 16
    %v131 = vsel %vm123, %v127, %v93
    %v132 = vsel %vm124, %v128, %v100
    %v133 = vsel %vm125, %v129, %v107
    %v134 = vsel %vm126, %v130, %v114
    %vm135 = vcmp.ge.s32.totalorder %v83, 16
    %vm136 = vcmp.ge.s32.totalorder %v84, 16
    %vm137 = vcmp.ge.s32.totalorder %v85, 16
    %vm138 = vcmp.ge.s32.totalorder %v86, 16
    %v139 = vsel %vm135, 1.0, 0.0
    %v140 = vsel %vm136, 1.0, 0.0
    %v141 = vsel %vm137, 1.0, 0.0
    %v142 = vsel %vm138, 1.0, 0.0
    %v143 = vpack.c.bf16 %v139, %v139
    %v144 = vpack.c.bf16 %v140, %v140
    %v145 = vpack.c.bf16 %v141, %v141
    %v146 = vpack.c.bf16 %v142, %v142
    %vm147 = vcmp.lt.s32.totalorder %v83, 240
    %vm148 = vcmp.lt.s32.totalorder %v84, 240
    %vm149 = vcmp.lt.s32.totalorder %v85, 240
    %vm150 = vcmp.lt.s32.totalorder %v86, 240
    %v151 = vsel %vm147, 1.0, 0.0
    %v152 = vsel %vm148, 1.0, 0.0
    %v153 = vsel %vm149, 1.0, 0.0
    %v154 = vsel %vm150, 1.0, 0.0
    %v155 = vpack.c.bf16 %v151, %v151
    %v156 = vpack.c.bf16 %v152, %v152
    %v157 = vpack.c.bf16 %v153, %v153
    %v158 = vpack.c.bf16 %v154, %v154
    %vm159 = vcmp.ne.s32.totalorder %v131, 0
    %vm160 = vcmp.ne.s32.totalorder %v132, 0
    %vm161 = vcmp.ne.s32.totalorder %v133, 0
    %vm162 = vcmp.ne.s32.totalorder %v134, 0
    %v163 = vsel %vm159, 1.0, 0.0
    %v164 = vsel %vm160, 1.0, 0.0
    %v165 = vsel %vm161, 1.0, 0.0
    %v166 = vsel %vm162, 1.0, 0.0
    %v167 = vpack.c.bf16 %v163, %v163
    %v168 = vpack.c.bf16 %v164, %v164
    %v169 = vpack.c.bf16 %v165, %v165
    %v170 = vpack.c.bf16 %v166, %v166
    %vm171 = vcmp.ne.s32.totalorder %v131, 15
    %vm172 = vcmp.ne.s32.totalorder %v132, 15
    %vm173 = vcmp.ne.s32.totalorder %v133, 15
    %vm174 = vcmp.ne.s32.totalorder %v134, 15
    %v175 = vsel %vm171, 1.0, 0.0
    %v176 = vsel %vm172, 1.0, 0.0
    %v177 = vsel %vm173, 1.0, 0.0
    %v178 = vsel %vm174, 1.0, 0.0
    %v179 = vpack.c.bf16 %v175, %v175
    %v180 = vpack.c.bf16 %v176, %v176
    %v181 = vpack.c.bf16 %v177, %v177
    %v182 = vpack.c.bf16 %v178, %v178
    %v183 = vld [vmem:[%s0] sm:$0xff]
    %v184 = vld [vmem:[%s0 + $0x8] sm:$0xff]
    %v185 = vld [vmem:[%s0 + $0x10] sm:$0xff]
    %v186 = vld [vmem:[%s0 + $0x18] sm:$0xff]
    %v187 = vunpack.c.l.bf16 %v183
    %v188 = vunpack.c.h.bf16 %v183
    %v189 = vunpack.c.l.bf16 %v184
    %v190 = vunpack.c.h.bf16 %v184
    %v191 = vunpack.c.l.bf16 %v185
    %v192 = vunpack.c.h.bf16 %v185
    %v193 = vunpack.c.l.bf16 %v186
    %v194 = vunpack.c.h.bf16 %v186
    %195 = vrot.lane.b32.xlu0 %v187, 17
    %v196 = vpop.permute.xlu0 %195
    %197 = vrot.lane.b32.xlu0 %v191, 17
    %v198 = vpop.permute.xlu0 %197
    %199 = vrot.lane.b32.xlu0 %v188, 17
    %v200 = vpop.permute.xlu0 %199
    %201 = vrot.lane.b32.xlu0 %v192, 17
    %v202 = vpop.permute.xlu0 %201
    %203 = vrot.lane.b32.xlu0 %v189, 17
    %v204 = vpop.permute.xlu0 %203
    %205 = vrot.lane.b32.xlu0 %v193, 17
    %v206 = vpop.permute.xlu0 %205
    %207 = vrot.lane.b32.xlu0 %v190, 17
    %v208 = vpop.permute.xlu0 %207
    %209 = vrot.lane.b32.xlu0 %v194, 17
    %v210 = vpop.permute.xlu0 %209
    %vm211 = vcmp.lt.s32.totalorder %v35, 17
    %v212 = vsel %vm211, %v204, %v208
    %v213 = vsel %vm211, %v206, %v210
    %v214 = vsel %vm211, %v200, %v204
    %v215 = vsel %vm211, %v202, %v206
    %v216 = vsel %vm211, %v196, %v200
    %v217 = vsel %vm211, %v198, %v202
    %v218 = vsel %vm211, %v208, %v196
    %v219 = vsel %vm211, %v210, %v198
    %v220 = vpack.c.bf16 %v219, %v218
    %v221 = vpack.c.bf16 %v217, %v216
    %v222 = vpack.c.bf16 %v215, %v214
    %v223 = vpack.c.bf16 %v213, %v212
    %v224 = vmul.bf16 %v220, %v143
    %v225 = vmul.bf16 %v221, %v144
    %v226 = vmul.bf16 %v222, %v145
    %v227 = vmul.bf16 %v223, %v146
    %v228 = vmul.bf16 %v224, %v167
    %v229 = vmul.bf16 %v225, %v168
    %v230 = vmul.bf16 %v226, %v169
    %v231 = vmul.bf16 %v227, %v170
    %232 = vst [vmem:[#allocation2] sm:$0xff] %v228
    %233 = vst [vmem:[#allocation2 + $0x8] sm:$0xff] %v229
    %234 = vst [vmem:[#allocation2 + $0x10] sm:$0xff] %v230
    %235 = vst [vmem:[#allocation2 + $0x18] sm:$0xff] %v231
    %236 = vrot.lane.b32.xlu0 %v187, 16
    %v237 = vpop.permute.xlu0 %236
    %238 = vrot.lane.b32.xlu0 %v191, 16
    %v239 = vpop.permute.xlu0 %238
    %240 = vrot.lane.b32.xlu0 %v188, 16
    %v241 = vpop.permute.xlu0 %240
    %242 = vrot.lane.b32.xlu0 %v192, 16
    %v243 = vpop.permute.xlu0 %242
    %244 = vrot.lane.b32.xlu0 %v189, 16
    %v245 = vpop.permute.xlu0 %244
    %246 = vrot.lane.b32.xlu0 %v193, 16
    %v247 = vpop.permute.xlu0 %246
    %248 = vrot.lane.b32.xlu0 %v190, 16
    %v249 = vpop.permute.xlu0 %248
    %250 = vrot.lane.b32.xlu0 %v194, 16
    %v251 = vpop.permute.xlu0 %250
    %vm252 = vcmp.lt.s32.totalorder %v35, 16
    %v253 = vsel %vm252, %v245, %v249
    %v254 = vsel %vm252, %v247, %v251
    %v255 = vsel %vm252, %v241, %v245
    %v256 = vsel %vm252, %v243, %v247
    %v257 = vsel %vm252, %v237, %v241
    %v258 = vsel %vm252, %v239, %v243
    %v259 = vsel %vm252, %v249, %v237
    %v260 = vsel %vm252, %v251, %v239
    %v261 = vpack.c.bf16 %v260, %v259
    %v262 = vpack.c.bf16 %v258, %v257
    %v263 = vpack.c.bf16 %v256, %v255
    %v264 = vpack.c.bf16 %v254, %v253
    %v265 = vmul.bf16 %v261, %v143
    %v266 = vmul.bf16 %v262, %v144
    %v267 = vmul.bf16 %v263, %v145
    %v268 = vmul.bf16 %v264, %v146
    %269 = vst [vmem:[#allocation2 + $0x20] sm:$0xff] %v265
    %270 = vst [vmem:[#allocation2 + $0x28] sm:$0xff] %v266
    %271 = vst [vmem:[#allocation2 + $0x30] sm:$0xff] %v267
    %272 = vst [vmem:[#allocation2 + $0x38] sm:$0xff] %v268
    %273 = vrot.lane.b32.xlu0 %v187, 15
    %v274 = vpop.permute.xlu0 %273
    %275 = vrot.lane.b32.xlu0 %v191, 15
    %v276 = vpop.permute.xlu0 %275
    %277 = vrot.lane.b32.xlu0 %v188, 15
    %v278 = vpop.permute.xlu0 %277
    %279 = vrot.lane.b32.xlu0 %v192, 15
    %v280 = vpop.permute.xlu0 %279
    %281 = vrot.lane.b32.xlu0 %v189, 15
    %v282 = vpop.permute.xlu0 %281
    %283 = vrot.lane.b32.xlu0 %v193, 15
    %v284 = vpop.permute.xlu0 %283
    %285 = vrot.lane.b32.xlu0 %v190, 15
    %v286 = vpop.permute.xlu0 %285
    %287 = vrot.lane.b32.xlu0 %v194, 15
    %v288 = vpop.permute.xlu0 %287
    %vm289 = vcmp.lt.s32.totalorder %v35, 15
    %v290 = vsel %vm289, %v282, %v286
    %v291 = vsel %vm289, %v284, %v288
    %v292 = vsel %vm289, %v278, %v282
    %v293 = vsel %vm289, %v280, %v284
    %v294 = vsel %vm289, %v274, %v278
    %v295 = vsel %vm289, %v276, %v280
    %v296 = vsel %vm289, %v286, %v274
    %v297 = vsel %vm289, %v288, %v276
    %v298 = vpack.c.bf16 %v297, %v296
    %v299 = vpack.c.bf16 %v295, %v294
    %v300 = vpack.c.bf16 %v293, %v292
    %v301 = vpack.c.bf16 %v291, %v290
    %v302 = vmul.bf16 %v298, %v143
    %v303 = vmul.bf16 %v299, %v144
    %v304 = vmul.bf16 %v300, %v145
    %v305 = vmul.bf16 %v301, %v146
    %v306 = vmul.bf16 %v302, %v179
    %v307 = vmul.bf16 %v303, %v180
    %v308 = vmul.bf16 %v304, %v181
    %v309 = vmul.bf16 %v305, %v182
    %310 = vst [vmem:[#allocation2 + $0x40] sm:$0xff] %v306
    %311 = vst [vmem:[#allocation2 + $0x48] sm:$0xff] %v307
    %312 = vst [vmem:[#allocation2 + $0x50] sm:$0xff] %v308
    %313 = vst [vmem:[#allocation2 + $0x58] sm:$0xff] %v309
    %314 = vrot.lane.b32.xlu0 %v187, 1
    %v315 = vpop.permute.xlu0 %314
    %316 = vrot.lane.b32.xlu0 %v191, 1
    %v317 = vpop.permute.xlu0 %316
    %318 = vrot.lane.b32.xlu0 %v188, 1
    %v319 = vpop.permute.xlu0 %318
    %320 = vrot.lane.b32.xlu0 %v192, 1
    %v321 = vpop.permute.xlu0 %320
    %322 = vrot.lane.b32.xlu0 %v189, 1
    %v323 = vpop.permute.xlu0 %322
    %324 = vrot.lane.b32.xlu0 %v193, 1
    %v325 = vpop.permute.xlu0 %324
    %326 = vrot.lane.b32.xlu0 %v190, 1
    %v327 = vpop.permute.xlu0 %326
    %328 = vrot.lane.b32.xlu0 %v194, 1
    %v329 = vpop.permute.xlu0 %328
    %vm330 = vcmp.lt.s32.totalorder %v35, 1
    %v331 = vsel %vm330, %v323, %v327
    %v332 = vsel %vm330, %v325, %v329
    %v333 = vsel %vm330, %v319, %v323
    %v334 = vsel %vm330, %v321, %v325
    %v335 = vsel %vm330, %v315, %v319
    %v336 = vsel %vm330, %v317, %v321
    %v337 = vsel %vm330, %v327, %v315
    %v338 = vsel %vm330, %v329, %v317
    %v339 = vpack.c.bf16 %v338, %v337
    %v340 = vpack.c.bf16 %v336, %v335
    %v341 = vpack.c.bf16 %v334, %v333
    %v342 = vpack.c.bf16 %v332, %v331
    %v343 = vmul.bf16 %v339, %v167
    %v344 = vmul.bf16 %v340, %v168
    %v345 = vmul.bf16 %v341, %v169
    %v346 = vmul.bf16 %v342, %v170
    %347 = vst [vmem:[#allocation2 + $0x60] sm:$0xff] %v343
    %348 = vst [vmem:[#allocation2 + $0x68] sm:$0xff] %v344
    %349 = vst [vmem:[#allocation2 + $0x70] sm:$0xff] %v345
    %350 = vst [vmem:[#allocation2 + $0x78] sm:$0xff] %v346
    %v355 = vunpack.c.l.b16 %v183
    %v356 = vunpack.c.h.b16 %v183
    %v357 = vunpack.c.l.b16 %v184
    %v358 = vunpack.c.h.b16 %v184
    %v359 = vunpack.c.l.b16 %v185
    %v360 = vunpack.c.h.b16 %v185
    %v361 = vunpack.c.l.b16 %v186
    %v362 = vunpack.c.h.b16 %v186
    %v363 = vpack.c.b16 %v359, %v355
    %v364 = vpack.c.b16 %v360, %v356
    %v365 = vpack.c.b16 %v361, %v357
    %v366 = vpack.c.b16 %v362, %v358
    %371 = vst [vmem:[#allocation2 + $0x80] sm:$0xff] %v363
    %372 = vst [vmem:[#allocation2 + $0x88] sm:$0xff] %v364
    %373 = vst [vmem:[#allocation2 + $0x90] sm:$0xff] %v365
    %374 = vst [vmem:[#allocation2 + $0x98] sm:$0xff] %v366
    %375 = vrot.lane.b32.xlu0 %v187, 127
    %v376 = vpop.permute.xlu0 %375
    %377 = vrot.lane.b32.xlu0 %v191, 127
    %v378 = vpop.permute.xlu0 %377
    %379 = vrot.lane.b32.xlu0 %v188, 127
    %v380 = vpop.permute.xlu0 %379
    %381 = vrot.lane.b32.xlu0 %v192, 127
    %v382 = vpop.permute.xlu0 %381
    %383 = vrot.lane.b32.xlu0 %v189, 127
    %v384 = vpop.permute.xlu0 %383
    %385 = vrot.lane.b32.xlu0 %v193, 127
    %v386 = vpop.permute.xlu0 %385
    %387 = vrot.lane.b32.xlu0 %v190, 127
    %v388 = vpop.permute.xlu0 %387
    %389 = vrot.lane.b32.xlu0 %v194, 127
    %v390 = vpop.permute.xlu0 %389
    %vm391 = vcmp.lt.s32.totalorder %v35, 127
    %v392 = vsel %vm391, %v384, %v388
    %v393 = vsel %vm391, %v386, %v390
    %v394 = vsel %vm391, %v380, %v384
    %v395 = vsel %vm391, %v382, %v386
    %v396 = vsel %vm391, %v376, %v380
    %v397 = vsel %vm391, %v378, %v382
    %v398 = vsel %vm391, %v388, %v376
    %v399 = vsel %vm391, %v390, %v378
    %v400 = vpack.c.bf16 %v397, %v396
    %v401 = vpack.c.bf16 %v395, %v394
    %v402 = vpack.c.bf16 %v393, %v392
    %v403 = vpack.c.bf16 %v399, %v398
    %v404 = vmul.bf16 %v400, %v179
    %v405 = vmul.bf16 %v401, %v180
    %v406 = vmul.bf16 %v402, %v181
    %v407 = vmul.bf16 %v403, %v182
    %408 = vst [vmem:[#allocation2 + $0xa0] sm:$0xff] %v404
    %409 = vst [vmem:[#allocation2 + $0xa8] sm:$0xff] %v405
    %410 = vst [vmem:[#allocation2 + $0xb0] sm:$0xff] %v406
    %411 = vst [vmem:[#allocation2 + $0xb8] sm:$0xff] %v407
    %412 = vrot.lane.b32.xlu0 %v187, 113
    %v413 = vpop.permute.xlu0 %412
    %414 = vrot.lane.b32.xlu0 %v191, 113
    %v415 = vpop.permute.xlu0 %414
    %416 = vrot.lane.b32.xlu0 %v188, 113
    %v417 = vpop.permute.xlu0 %416
    %418 = vrot.lane.b32.xlu0 %v192, 113
    %v419 = vpop.permute.xlu0 %418
    %420 = vrot.lane.b32.xlu0 %v189, 113
    %v421 = vpop.permute.xlu0 %420
    %422 = vrot.lane.b32.xlu0 %v193, 113
    %v423 = vpop.permute.xlu0 %422
    %424 = vrot.lane.b32.xlu0 %v190, 113
    %v425 = vpop.permute.xlu0 %424
    %426 = vrot.lane.b32.xlu0 %v194, 113
    %v427 = vpop.permute.xlu0 %426
    %vm428 = vcmp.lt.s32.totalorder %v35, 113
    %v429 = vsel %vm428, %v421, %v425
    %v430 = vsel %vm428, %v423, %v427
    %v431 = vsel %vm428, %v417, %v421
    %v432 = vsel %vm428, %v419, %v423
    %v433 = vsel %vm428, %v413, %v417
    %v434 = vsel %vm428, %v415, %v419
    %v435 = vsel %vm428, %v425, %v413
    %v436 = vsel %vm428, %v427, %v415
    %v437 = vpack.c.bf16 %v434, %v433
    %v438 = vpack.c.bf16 %v432, %v431
    %v439 = vpack.c.bf16 %v430, %v429
    %v440 = vpack.c.bf16 %v436, %v435
    %v441 = vmul.bf16 %v437, %v155
    %v442 = vmul.bf16 %v438, %v156
    %v443 = vmul.bf16 %v439, %v157
    %v444 = vmul.bf16 %v440, %v158
    %v445 = vmul.bf16 %v441, %v167
    %v446 = vmul.bf16 %v442, %v168
    %v447 = vmul.bf16 %v443, %v169
    %v448 = vmul.bf16 %v444, %v170
    %449 = vst [vmem:[#allocation2 + $0xc0] sm:$0xff] %v445
    %450 = vst [vmem:[#allocation2 + $0xc8] sm:$0xff] %v446
    %451 = vst [vmem:[#allocation2 + $0xd0] sm:$0xff] %v447
    %452 = vst [vmem:[#allocation2 + $0xd8] sm:$0xff] %v448
    %453 = vrot.lane.b32.xlu0 %v187, 112
    %v454 = vpop.permute.xlu0 %453
    %455 = vrot.lane.b32.xlu0 %v191, 112
    %v456 = vpop.permute.xlu0 %455
    %457 = vrot.lane.b32.xlu0 %v188, 112
    %v458 = vpop.permute.xlu0 %457
    %459 = vrot.lane.b32.xlu0 %v192, 112
    %v460 = vpop.permute.xlu0 %459
    %461 = vrot.lane.b32.xlu0 %v189, 112
    %v462 = vpop.permute.xlu0 %461
    %463 = vrot.lane.b32.xlu0 %v193, 112
    %v464 = vpop.permute.xlu0 %463
    %465 = vrot.lane.b32.xlu0 %v190, 112
    %v466 = vpop.permute.xlu0 %465
    %467 = vrot.lane.b32.xlu0 %v194, 112
    %v468 = vpop.permute.xlu0 %467
    %vm469 = vcmp.lt.s32.totalorder %v35, 112
    %v470 = vsel %vm469, %v462, %v466
    %v471 = vsel %vm469, %v464, %v468
    %v472 = vsel %vm469, %v458, %v462
    %v473 = vsel %vm469, %v460, %v464
    %v474 = vsel %vm469, %v454, %v458
    %v475 = vsel %vm469, %v456, %v460
    %v476 = vsel %vm469, %v466, %v454
    %v477 = vsel %vm469, %v468, %v456
    %v478 = vpack.c.bf16 %v475, %v474
    %v479 = vpack.c.bf16 %v473, %v472
    %v480 = vpack.c.bf16 %v471, %v470
    %v481 = vpack.c.bf16 %v477, %v476
    %v482 = vmul.bf16 %v478, %v155
    %v483 = vmul.bf16 %v479, %v156
    %v484 = vmul.bf16 %v480, %v157
    %v485 = vmul.bf16 %v481, %v158
    %486 = vst [vmem:[#allocation2 + $0xe0] sm:$0xff] %v482
    %487 = vst [vmem:[#allocation2 + $0xe8] sm:$0xff] %v483
    %488 = vst [vmem:[#allocation2 + $0xf0] sm:$0xff] %v484
    %489 = vst [vmem:[#allocation2 + $0xf8] sm:$0xff] %v485
    %490 = vrot.lane.b32.xlu0 %v187, 111
    %v491 = vpop.permute.xlu0 %490
    %492 = vrot.lane.b32.xlu0 %v191, 111
    %v493 = vpop.permute.xlu0 %492
    %494 = vrot.lane.b32.xlu0 %v188, 111
    %v495 = vpop.permute.xlu0 %494
    %496 = vrot.lane.b32.xlu0 %v192, 111
    %v497 = vpop.permute.xlu0 %496
    %498 = vrot.lane.b32.xlu0 %v189, 111
    %v499 = vpop.permute.xlu0 %498
    %500 = vrot.lane.b32.xlu0 %v193, 111
    %v501 = vpop.permute.xlu0 %500
    %502 = vrot.lane.b32.xlu0 %v190, 111
    %v503 = vpop.permute.xlu0 %502
    %504 = vrot.lane.b32.xlu0 %v194, 111
    %v505 = vpop.permute.xlu0 %504
    %vm506 = vcmp.lt.s32.totalorder %v35, 111
    %v507 = vsel %vm506, %v499, %v503
    %v508 = vsel %vm506, %v501, %v505
    %v509 = vsel %vm506, %v495, %v499
    %v510 = vsel %vm506, %v497, %v501
    %v511 = vsel %vm506, %v491, %v495
    %v512 = vsel %vm506, %v493, %v497
    %v513 = vsel %vm506, %v503, %v491
    %v514 = vsel %vm506, %v505, %v493
    %v515 = vpack.c.bf16 %v512, %v511
    %v516 = vpack.c.bf16 %v510, %v509
    %v517 = vpack.c.bf16 %v508, %v507
    %v518 = vpack.c.bf16 %v514, %v513
    %v519 = vmul.bf16 %v515, %v155
    %v520 = vmul.bf16 %v516, %v156
    %v521 = vmul.bf16 %v517, %v157
    %v522 = vmul.bf16 %v518, %v158
    %v523 = vmul.bf16 %v519, %v179
    %v524 = vmul.bf16 %v520, %v180
    %v525 = vmul.bf16 %v521, %v181
    %v526 = vmul.bf16 %v522, %v182
    %527 = vst [vmem:[#allocation2 + $0x100] sm:$0xff] %v523
    %528 = vst [vmem:[#allocation2 + $0x108] sm:$0xff] %v524
    %529 = vst [vmem:[#allocation2 + $0x110] sm:$0xff] %v525
    %530 = vst [vmem:[#allocation2 + $0x118] sm:$0xff] %v526
    %v531 = vld [vmem:[%s1] sm:$0xff]
    %v532 = vld [vmem:[%s1 + $0x8] sm:$0xff]
    %v533 = vld [vmem:[#allocation2] sm:$0xff]
    %v534 = vld [vmem:[#allocation2 + $0x8] sm:$0xff]
    %v535 = vld [vmem:[#allocation2 + $0x10] sm:$0xff]
    %v536 = vld [vmem:[#allocation2 + $0x18] sm:$0xff]
    %v537 = vld [vmem:[#allocation2 + $0x20] sm:$0xff]
    %v538 = vld [vmem:[#allocation2 + $0x28] sm:$0xff]
    %v539 = vld [vmem:[#allocation2 + $0x30] sm:$0xff]
    %v540 = vld [vmem:[#allocation2 + $0x38] sm:$0xff]
    %v541 = vld [vmem:[#allocation2 + $0x40] sm:$0xff]
    %v542 = vld [vmem:[#allocation2 + $0x48] sm:$0xff]
    %v543 = vld [vmem:[#allocation2 + $0x50] sm:$0xff]
    %v544 = vld [vmem:[#allocation2 + $0x58] sm:$0xff]
    %v545 = vld [vmem:[#allocation2 + $0x60] sm:$0xff]
    %v546 = vld [vmem:[#allocation2 + $0x68] sm:$0xff]
    %v547 = vld [vmem:[#allocation2 + $0x70] sm:$0xff]
    %v548 = vld [vmem:[#allocation2 + $0x78] sm:$0xff]
    %v549 = vld [vmem:[#allocation2 + $0x80] sm:$0xff]
    %v550 = vld [vmem:[#allocation2 + $0x88] sm:$0xff]
    %v551 = vld [vmem:[#allocation2 + $0x90] sm:$0xff]
    %v552 = vld [vmem:[#allocation2 + $0x98] sm:$0xff]
    %v553 = vld [vmem:[#allocation2 + $0xa0] sm:$0xff]
    %v554 = vld [vmem:[#allocation2 + $0xa8] sm:$0xff]
    %v555 = vld [vmem:[#allocation2 + $0xb0] sm:$0xff]
    %v556 = vld [vmem:[#allocation2 + $0xb8] sm:$0xff]
    %v557 = vld [vmem:[#allocation2 + $0xc0] sm:$0xff]
    %v558 = vld [vmem:[#allocation2 + $0xc8] sm:$0xff]
    %v559 = vld [vmem:[#allocation2 + $0xd0] sm:$0xff]
    %v560 = vld [vmem:[#allocation2 + $0xd8] sm:$0xff]
    %v561 = vld [vmem:[#allocation2 + $0xe0] sm:$0xff]
    %v562 = vld [vmem:[#allocation2 + $0xe8] sm:$0xff]
    %v563 = vld [vmem:[#allocation2 + $0xf0] sm:$0xff]
    %v564 = vld [vmem:[#allocation2 + $0xf8] sm:$0xff]
    %v565 = vld [vmem:[#allocation2 + $0x100] sm:$0xff]
    %v566 = vld [vmem:[#allocation2 + $0x108] sm:$0xff]
    %v567 = vld [vmem:[#allocation2 + $0x110] sm:$0xff]
    %v568 = vld [vmem:[#allocation2 + $0x118] sm:$0xff]
    %v569 = vld [vmem:[%s2] sm:$0xff]
    %v570 = vld [vmem:[%s2 + $0x8] sm:$0xff]
    %572 = vset.pattern.permute.xlu0 0
    %573 = vperm.xlu0 %572, %v569
    %v574 = vpop.permute.xlu0 %573
    %577 = vset.pattern.permute.xlu0 0
    %578 = vperm.xlu0 %577, %v570
    %v579 = vpop.permute.xlu0 %578
    %v583 = vunpack.c.l.b16 %v531
    %v584 = vunpack.c.h.b16 %v531
    %v585 = vunpack.c.l.b16 %v532
    %v586 = vunpack.c.h.b16 %v532
    %v587 = vpack.c.b16 %v585, %v583
    %v588 = vpack.c.b16 %v586, %v584
    %vm590 = vcmask 130048
    %v592 = vsel %vm590, %v588, 0
    %594 = vmatprep.subr.bf16.mxu0 %v534
    %595 = vmatpush1.bf16.msra.mxu0 %v533
    %596 = vmatprep.subr.bf16.mxu0 %v538
    %597 = vmatpush1.bf16.msra.mxu0 %v537
    %598 = vmatprep.subr.bf16.mxu0 %v542
    %599 = vmatpush1.bf16.msra.mxu0 %v541
    %600 = vmatprep.subr.bf16.mxu0 %v546
    %601 = vmatpush1.bf16.msra.mxu0 %v545
    %602 = vmatprep.subr.bf16.mxu0 %v550
    %603 = vmatpush1.bf16.msra.mxu0 %v549
    %604 = vmatprep.subr.bf16.mxu0 %v554
    %605 = vmatpush1.bf16.msra.mxu0 %v553
    %606 = vmatprep.subr.bf16.mxu0 %v558
    %607 = vmatpush1.bf16.msra.mxu0 %v557
    %608 = vmatprep.subr.bf16.mxu0 %v562
    %609 = vmatpush1.bf16.msra.mxu0 %v561
    %610 = vmatprep.subr.bf16.mxu0 %v566
    %611 = vmatpush1.bf16.msra.mxu0 %v565
    %612 = vmatprep.subr.bf16.mxu0 0
    %613 = vmatpush1.bf16.msra.mxu0 0
    %614 = vmatprep.subr.bf16.mxu0 0
    %615 = vmatpush1.bf16.msra.mxu0 0
    %616 = vmatprep.subr.bf16.mxu0 0
    %617 = vmatpush1.bf16.msra.mxu0 0
    %618 = vmatprep.subr.bf16.mxu0 0
    %619 = vmatpush1.bf16.msra.mxu0 0
    %620 = vmatprep.subr.bf16.mxu0 0
    %621 = vmatpush1.bf16.msra.mxu0 0
    %622 = vmatprep.subr.bf16.mxu0 0
    %623 = vmatpush1.bf16.msra.mxu0 0
    %624 = vmatprep.subr.bf16.mxu0 0
    %625 = vmatpush1.bf16.msra.mxu0 0
    %626 = vmatprep.mubr.bf16.mxu0 %v592
    %627 = vmatmul.mubr.bf16.gmra.mrb[0].mxu0 %v587
    %v628 = vpop.f32.mrb[0].mxu0
    %v629 = vadd.f32 %v574, %v628
    %v630 = vpop.f32.mrb[0].mxu0
    %v631 = vadd.f32 %v574, %v630
    %v632 = vpop.f32.mrb[0].mxu0
    %v633 = vadd.f32 %v579, %v632
    %v634 = vpop.f32.mrb[0].mxu0
    %v635 = vadd.f32 %v579, %v634
    %636 = vdwg.mxu0
    %637 = vmatprep.subr.bf16.mxu0 %v536
    %638 = vmatpush1.bf16.msra.mxu0 %v535
    %639 = vmatprep.subr.bf16.mxu0 %v540
    %640 = vmatpush1.bf16.msra.mxu0 %v539
    %641 = vmatprep.subr.bf16.mxu0 %v544
    %642 = vmatpush1.bf16.msra.mxu0 %v543
    %643 = vmatprep.subr.bf16.mxu0 %v548
    %644 = vmatpush1.bf16.msra.mxu0 %v547
    %645 = vmatprep.subr.bf16.mxu0 %v552
    %646 = vmatpush1.bf16.msra.mxu0 %v551
    %647 = vmatprep.subr.bf16.mxu0 %v556
    %648 = vmatpush1.bf16.msra.mxu0 %v555
    %649 = vmatprep.subr.bf16.mxu0 %v560
    %650 = vmatpush1.bf16.msra.mxu0 %v559
    %651 = vmatprep.subr.bf16.mxu0 %v564
    %652 = vmatpush1.bf16.msra.mxu0 %v563
    %653 = vmatprep.subr.bf16.mxu0 %v568
    %654 = vmatpush1.bf16.msra.mxu0 %v567
    %655 = vmatprep.subr.bf16.mxu0 0
    %656 = vmatpush1.bf16.msra.mxu0 0
    %657 = vmatprep.subr.bf16.mxu0 0
    %658 = vmatpush1.bf16.msra.mxu0 0
    %659 = vmatprep.subr.bf16.mxu0 0
    %660 = vmatpush1.bf16.msra.mxu0 0
    %661 = vmatprep.subr.bf16.mxu0 0
    %662 = vmatpush1.bf16.msra.mxu0 0
    %663 = vmatprep.subr.bf16.mxu0 0
    %664 = vmatpush1.bf16.msra.mxu0 0
    %665 = vmatprep.subr.bf16.mxu0 0
    %666 = vmatpush1.bf16.msra.mxu0 0
    %667 = vmatprep.subr.bf16.mxu0 0
    %668 = vmatpush1.bf16.msra.mxu0 0
    %669 = vmatprep.mubr.bf16.mxu0 %v592
    %670 = vmatmul.mubr.bf16.gmra.mrb[0].mxu0 %v587
    %v671 = vpop.f32.mrb[0].mxu0
    %v672 = vadd.f32 %v574, %v671
    %v673 = vpop.f32.mrb[0].mxu0
    %v674 = vadd.f32 %v574, %v673
    %v675 = vpop.f32.mrb[0].mxu0
    %v676 = vadd.f32 %v579, %v675
    %v677 = vpop.f32.mrb[0].mxu0
    %v678 = vadd.f32 %v579, %v677
    %679 = vdwg.mxu0
    %v680 = vmax.f32 %v629, 0.0
    %v681 = vmax.f32 %v631, 0.0
    %v682 = vmax.f32 %v672, 0.0
    %v683 = vmax.f32 %v674, 0.0
    %v684 = vmax.f32 %v633, 0.0
    %v685 = vmax.f32 %v635, 0.0
    %v686 = vmax.f32 %v676, 0.0
    %v687 = vmax.f32 %v678, 0.0
    %v688 = vadd.f32 %v680, %v681
    %v689 = vadd.f32 %v688, %v682
    %v690 = vadd.f32 %v689, %v683
    %691 = vadd.xlane.f32.xlu0 %v690
    %v692 = vpop.xlane.xlu0 %691
    %v693 = vadd.f32 %v684, %v685
    %v694 = vadd.f32 %v693, %v686
    %v695 = vadd.f32 %v694, %v687
    %696 = vadd.xlane.f32.xlu0 %v695
    %v697 = vpop.xlane.xlu0 %696
    %v698 = vmul.f32 %v692, 0.001953125
    %v699 = vmul.f32 %v697, 0.001953125
    %v700 = vsub.f32 %v680, %v698
    %v701 = vsub.f32 %v681, %v698
    %v702 = vsub.f32 %v682, %v698
    %v703 = vsub.f32 %v683, %v698
    %v704 = vsub.f32 %v684, %v699
    %v705 = vsub.f32 %v685, %v699
    %v706 = vsub.f32 %v686, %v699
    %v707 = vsub.f32 %v687, %v699
    %v708 = vmul.f32 %v700, %v700
    %v709 = vmul.f32 %v701, %v701
    %v710 = vmul.f32 %v702, %v702
    %v711 = vmul.f32 %v703, %v703
    %v712 = vmul.f32 %v704, %v704
    %v713 = vmul.f32 %v705, %v705
    %v714 = vmul.f32 %v706, %v706
    %v715 = vmul.f32 %v707, %v707
    %v716 = vadd.f32 %v708, %v709
    %v717 = vadd.f32 %v716, %v710
    %v718 = vadd.f32 %v717, %v711
    %719 = vadd.xlane.f32.xlu0 %v718
    %v720 = vpop.xlane.xlu0 %719
    %v721 = vadd.f32 %v712, %v713
    %v722 = vadd.f32 %v721, %v714
    %v723 = vadd.f32 %v722, %v715
    %724 = vadd.xlane.f32.xlu0 %v723
    %v725 = vpop.xlane.xlu0 %724
    %v726 = vmul.f32 %v720, 0.001953125
    %v727 = vmul.f32 %v725, 0.001953125
    %v728 = vld [vmem:[%s3] sm:$0xff]
    %v729 = vld [vmem:[%s3 + $0x8] sm:$0xff]
    %v730 = vadd.f32 %v726, 1e-05
    %v731 = vadd.f32 %v727, 1e-05
    %v732 = vrsqrt.pop %v730
    %v733 = vrsqrt.pop %v731
    %v734 = vmul.f32 %v728, %v732
    %v735 = vmul.f32 %v729, %v733
    %737 = vset.pattern.permute.xlu0 0
    %738 = vperm.xlu0 %737, %v734
    %v739 = vpop.permute.xlu0 %738
    %742 = vset.pattern.permute.xlu0 0
    %743 = vperm.xlu0 %742, %v735
    %v744 = vpop.permute.xlu0 %743
    %v746 = vmul.f32 %v700, %v739
    %v747 = vmul.f32 %v701, %v739
    %v748 = vmul.f32 %v702, %v739
    %v749 = vmul.f32 %v703, %v739
    %v750 = vmul.f32 %v704, %v744
    %v751 = vmul.f32 %v705, %v744
    %v752 = vmul.f32 %v706, %v744
    %v753 = vmul.f32 %v707, %v744
    %v754 = vld [vmem:[%s4] sm:$0xff]
    %v755 = vld [vmem:[%s4 + $0x8] sm:$0xff]
    %757 = vset.pattern.permute.xlu0 0
    %758 = vperm.xlu0 %757, %v754
    %v759 = vpop.permute.xlu0 %758
    %762 = vset.pattern.permute.xlu0 0
    %763 = vperm.xlu0 %762, %v755
    %v764 = vpop.permute.xlu0 %763
    %v766 = vadd.f32 %v746, %v759
    %v767 = vadd.f32 %v747, %v759
    %v768 = vadd.f32 %v748, %v759
    %v769 = vadd.f32 %v749, %v759
    %v770 = vadd.f32 %v750, %v764
    %v771 = vadd.f32 %v751, %v764
    %v772 = vadd.f32 %v752, %v764
    %v773 = vadd.f32 %v753, %v764
    %774 = vrot.lane.b32.xlu0 %v766, 17
    %v775 = vpop.permute.xlu0 %774
    %776 = vrot.lane.b32.xlu0 %v770, 17
    %v777 = vpop.permute.xlu0 %776
    %778 = vrot.lane.b32.xlu0 %v767, 17
    %v779 = vpop.permute.xlu0 %778
    %780 = vrot.lane.b32.xlu0 %v771, 17
    %v781 = vpop.permute.xlu0 %780
    %782 = vrot.lane.b32.xlu0 %v768, 17
    %v783 = vpop.permute.xlu0 %782
    %784 = vrot.lane.b32.xlu0 %v772, 17
    %v785 = vpop.permute.xlu0 %784
    %786 = vrot.lane.b32.xlu0 %v769, 17
    %v787 = vpop.permute.xlu0 %786
    %788 = vrot.lane.b32.xlu0 %v773, 17
    %v789 = vpop.permute.xlu0 %788
    %v790 = vsel %vm211, %v783, %v787
    %v791 = vsel %vm211, %v785, %v789
    %v792 = vsel %vm211, %v779, %v783
    %v793 = vsel %vm211, %v781, %v785
    %v794 = vsel %vm211, %v775, %v779
    %v795 = vsel %vm211, %v777, %v781
    %v796 = vsel %vm211, %v787, %v775
    %v797 = vsel %vm211, %v789, %v777
    %v798 = vpack.c.bf16 %v797, %v796
    %v799 = vpack.c.bf16 %v795, %v794
    %v800 = vpack.c.bf16 %v793, %v792
    %v801 = vpack.c.bf16 %v791, %v790
    %v802 = vmul.bf16 %v798, %v143
    %v803 = vmul.bf16 %v799, %v144
    %v804 = vmul.bf16 %v800, %v145
    %v805 = vmul.bf16 %v801, %v146
    %v806 = vmul.bf16 %v802, %v167
    %v807 = vmul.bf16 %v803, %v168
    %v808 = vmul.bf16 %v804, %v169
    %v809 = vmul.bf16 %v805, %v170
    %810 = vst [vmem:[#allocation2] sm:$0xff] %v806
    %811 = vst [vmem:[#allocation2 + $0x8] sm:$0xff] %v807
    %812 = vst [vmem:[#allocation2 + $0x10] sm:$0xff] %v808
    %813 = vst [vmem:[#allocation2 + $0x18] sm:$0xff] %v809
    %814 = vrot.lane.b32.xlu0 %v766, 16
    %v815 = vpop.permute.xlu0 %814
    %816 = vrot.lane.b32.xlu0 %v770, 16
    %v817 = vpop.permute.xlu0 %816
    %818 = vrot.lane.b32.xlu0 %v767, 16
    %v819 = vpop.permute.xlu0 %818
    %820 = vrot.lane.b32.xlu0 %v771, 16
    %v821 = vpop.permute.xlu0 %820
    %822 = vrot.lane.b32.xlu0 %v768, 16
    %v823 = vpop.permute.xlu0 %822
    %824 = vrot.lane.b32.xlu0 %v772, 16
    %v825 = vpop.permute.xlu0 %824
    %826 = vrot.lane.b32.xlu0 %v769, 16
    %v827 = vpop.permute.xlu0 %826
    %828 = vrot.lane.b32.xlu0 %v773, 16
    %v829 = vpop.permute.xlu0 %828
    %v830 = vsel %vm252, %v823, %v827
    %v831 = vsel %vm252, %v825, %v829
    %v832 = vsel %vm252, %v819, %v823
    %v833 = vsel %vm252, %v821, %v825
    %v834 = vsel %vm252, %v815, %v819
    %v835 = vsel %vm252, %v817, %v821
    %v836 = vsel %vm252, %v827, %v815
    %v837 = vsel %vm252, %v829, %v817
    %v838 = vpack.c.bf16 %v837, %v836
    %v839 = vpack.c.bf16 %v835, %v834
    %v840 = vpack.c.bf16 %v833, %v832
    %v841 = vpack.c.bf16 %v831, %v830
    %v842 = vmul.bf16 %v838, %v143
    %v843 = vmul.bf16 %v839, %v144
    %v844 = vmul.bf16 %v840, %v145
    %v845 = vmul.bf16 %v841, %v146
    %846 = vst [vmem:[#allocation2 + $0x20] sm:$0xff] %v842
    %847 = vst [vmem:[#allocation2 + $0x28] sm:$0xff] %v843
    %848 = vst [vmem:[#allocation2 + $0x30] sm:$0xff] %v844
    %849 = vst [vmem:[#allocation2 + $0x38] sm:$0xff] %v845
    %850 = vrot.lane.b32.xlu0 %v766, 15
    %v851 = vpop.permute.xlu0 %850
    %852 = vrot.lane.b32.xlu0 %v770, 15
    %v853 = vpop.permute.xlu0 %852
    %854 = vrot.lane.b32.xlu0 %v767, 15
    %v855 = vpop.permute.xlu0 %854
    %856 = vrot.lane.b32.xlu0 %v771, 15
    %v857 = vpop.permute.xlu0 %856
    %858 = vrot.lane.b32.xlu0 %v768, 15
    %v859 = vpop.permute.xlu0 %858
    %860 = vrot.lane.b32.xlu0 %v772, 15
    %v861 = vpop.permute.xlu0 %860
    %862 = vrot.lane.b32.xlu0 %v769, 15
    %v863 = vpop.permute.xlu0 %862
    %864 = vrot.lane.b32.xlu0 %v773, 15
    %v865 = vpop.permute.xlu0 %864
    %v866 = vsel %vm289, %v859, %v863
    %v867 = vsel %vm289, %v861, %v865
    %v868 = vsel %vm289, %v855, %v859
    %v869 = vsel %vm289, %v857, %v861
    %v870 = vsel %vm289, %v851, %v855
    %v871 = vsel %vm289, %v853, %v857
    %v872 = vsel %vm289, %v863, %v851
    %v873 = vsel %vm289, %v865, %v853
    %v874 = vpack.c.bf16 %v873, %v872
    %v875 = vpack.c.bf16 %v871, %v870
    %v876 = vpack.c.bf16 %v869, %v868
    %v877 = vpack.c.bf16 %v867, %v866
    %v878 = vmul.bf16 %v874, %v143
    %v879 = vmul.bf16 %v875, %v144
    %v880 = vmul.bf16 %v876, %v145
    %v881 = vmul.bf16 %v877, %v146
    %v882 = vmul.bf16 %v878, %v179
    %v883 = vmul.bf16 %v879, %v180
    %v884 = vmul.bf16 %v880, %v181
    %v885 = vmul.bf16 %v881, %v182
    %886 = vst [vmem:[#allocation2 + $0x40] sm:$0xff] %v882
    %887 = vst [vmem:[#allocation2 + $0x48] sm:$0xff] %v883
    %888 = vst [vmem:[#allocation2 + $0x50] sm:$0xff] %v884
    %889 = vst [vmem:[#allocation2 + $0x58] sm:$0xff] %v885
    %890 = vrot.lane.b32.xlu0 %v766, 1
    %v891 = vpop.permute.xlu0 %890
    %892 = vrot.lane.b32.xlu0 %v770, 1
    %v893 = vpop.permute.xlu0 %892
    %894 = vrot.lane.b32.xlu0 %v767, 1
    %v895 = vpop.permute.xlu0 %894
    %896 = vrot.lane.b32.xlu0 %v771, 1
    %v897 = vpop.permute.xlu0 %896
    %898 = vrot.lane.b32.xlu0 %v768, 1
    %v899 = vpop.permute.xlu0 %898
    %900 = vrot.lane.b32.xlu0 %v772, 1
    %v901 = vpop.permute.xlu0 %900
    %902 = vrot.lane.b32.xlu0 %v769, 1
    %v903 = vpop.permute.xlu0 %902
    %904 = vrot.lane.b32.xlu0 %v773, 1
    %v905 = vpop.permute.xlu0 %904
    %v906 = vsel %vm330, %v899, %v903
    %v907 = vsel %vm330, %v901, %v905
    %v908 = vsel %vm330, %v895, %v899
    %v909 = vsel %vm330, %v897, %v901
    %v910 = vsel %vm330, %v891, %v895
    %v911 = vsel %vm330, %v893, %v897
    %v912 = vsel %vm330, %v903, %v891
    %v913 = vsel %vm330, %v905, %v893
    %v914 = vpack.c.bf16 %v913, %v912
    %v915 = vpack.c.bf16 %v911, %v910
    %v916 = vpack.c.bf16 %v909, %v908
    %v917 = vpack.c.bf16 %v907, %v906
    %v918 = vmul.bf16 %v914, %v167
    %v919 = vmul.bf16 %v915, %v168
    %v920 = vmul.bf16 %v916, %v169
    %v921 = vmul.bf16 %v917, %v170
    %922 = vst [vmem:[#allocation2 + $0x60] sm:$0xff] %v918
    %923 = vst [vmem:[#allocation2 + $0x68] sm:$0xff] %v919
    %924 = vst [vmem:[#allocation2 + $0x70] sm:$0xff] %v920
    %925 = vst [vmem:[#allocation2 + $0x78] sm:$0xff] %v921
    %v926 = vpack.c.bf16 %v770, %v766
    %v927 = vpack.c.bf16 %v771, %v767
    %v928 = vpack.c.bf16 %v772, %v768
    %v929 = vpack.c.bf16 %v773, %v769
    %930 = vst [vmem:[#allocation2 + $0x80] sm:$0xff] %v926
    %931 = vst [vmem:[#allocation2 + $0x88] sm:$0xff] %v927
    %932 = vst [vmem:[#allocation2 + $0x90] sm:$0xff] %v928
    %933 = vst [vmem:[#allocation2 + $0x98] sm:$0xff] %v929
    %934 = vrot.lane.b32.xlu0 %v766, 127
    %v935 = vpop.permute.xlu0 %934
    %936 = vrot.lane.b32.xlu0 %v770, 127
    %v937 = vpop.permute.xlu0 %936
    %938 = vrot.lane.b32.xlu0 %v767, 127
    %v939 = vpop.permute.xlu0 %938
    %940 = vrot.lane.b32.xlu0 %v771, 127
    %v941 = vpop.permute.xlu0 %940
    %942 = vrot.lane.b32.xlu0 %v768, 127
    %v943 = vpop.permute.xlu0 %942
    %944 = vrot.lane.b32.xlu0 %v772, 127
    %v945 = vpop.permute.xlu0 %944
    %946 = vrot.lane.b32.xlu0 %v769, 127
    %v947 = vpop.permute.xlu0 %946
    %948 = vrot.lane.b32.xlu0 %v773, 127
    %v949 = vpop.permute.xlu0 %948
    %v950 = vsel %vm391, %v943, %v947
    %v951 = vsel %vm391, %v945, %v949
    %v952 = vsel %vm391, %v939, %v943
    %v953 = vsel %vm391, %v941, %v945
    %v954 = vsel %vm391, %v935, %v939
    %v955 = vsel %vm391, %v937, %v941
    %v956 = vsel %vm391, %v947, %v935
    %v957 = vsel %vm391, %v949, %v937
    %v958 = vpack.c.bf16 %v955, %v954
    %v959 = vpack.c.bf16 %v953, %v952
    %v960 = vpack.c.bf16 %v951, %v950
    %v961 = vpack.c.bf16 %v957, %v956
    %v962 = vmul.bf16 %v958, %v179
    %v963 = vmul.bf16 %v959, %v180
    %v964 = vmul.bf16 %v960, %v181
    %v965 = vmul.bf16 %v961, %v182
    %966 = vst [vmem:[#allocation2 + $0xa0] sm:$0xff] %v962
    %967 = vst [vmem:[#allocation2 + $0xa8] sm:$0xff] %v963
    %968 = vst [vmem:[#allocation2 + $0xb0] sm:$0xff] %v964
    %969 = vst [vmem:[#allocation2 + $0xb8] sm:$0xff] %v965
    %970 = vrot.lane.b32.xlu0 %v766, 113
    %v971 = vpop.permute.xlu0 %970
    %972 = vrot.lane.b32.xlu0 %v770, 113
    %v973 = vpop.permute.xlu0 %972
    %974 = vrot.lane.b32.xlu0 %v767, 113
    %v975 = vpop.permute.xlu0 %974
    %976 = vrot.lane.b32.xlu0 %v771, 113
    %v977 = vpop.permute.xlu0 %976
    %978 = vrot.lane.b32.xlu0 %v768, 113
    %v979 = vpop.permute.xlu0 %978
    %980 = vrot.lane.b32.xlu0 %v772, 113
    %v981 = vpop.permute.xlu0 %980
    %982 = vrot.lane.b32.xlu0 %v769, 113
    %v983 = vpop.permute.xlu0 %982
    %984 = vrot.lane.b32.xlu0 %v773, 113
    %v985 = vpop.permute.xlu0 %984
    %v986 = vsel %vm428, %v979, %v983
    %v987 = vsel %vm428, %v981, %v985
    %v988 = vsel %vm428, %v975, %v979
    %v989 = vsel %vm428, %v977, %v981
    %v990 = vsel %vm428, %v971, %v975
    %v991 = vsel %vm428, %v973, %v977
    %v992 = vsel %vm428, %v983, %v971
    %v993 = vsel %vm428, %v985, %v973
    %v994 = vpack.c.bf16 %v991, %v990
    %v995 = vpack.c.bf16 %v989, %v988
    %v996 = vpack.c.bf16 %v987, %v986
    %v997 = vpack.c.bf16 %v993, %v992
    %v998 = vmul.bf16 %v994, %v155
    %v999 = vmul.bf16 %v995, %v156
    %v1000 = vmul.bf16 %v996, %v157
    %v1001 = vmul.bf16 %v997, %v158
    %v1002 = vmul.bf16 %v998, %v167
    %v1003 = vmul.bf16 %v999, %v168
    %v1004 = vmul.bf16 %v1000, %v169
    %v1005 = vmul.bf16 %v1001, %v170
    %1006 = vst [vmem:[#allocation2 + $0xc0] sm:$0xff] %v1002
    %1007 = vst [vmem:[#allocation2 + $0xc8] sm:$0xff] %v1003
    %1008 = vst [vmem:[#allocation2 + $0xd0] sm:$0xff] %v1004
    %1009 = vst [vmem:[#allocation2 + $0xd8] sm:$0xff] %v1005
    %1010 = vrot.lane.b32.xlu0 %v766, 112
    %v1011 = vpop.permute.xlu0 %1010
    %1012 = vrot.lane.b32.xlu0 %v770, 112
    %v1013 = vpop.permute.xlu0 %1012
    %1014 = vrot.lane.b32.xlu0 %v767, 112
    %v1015 = vpop.permute.xlu0 %1014
    %1016 = vrot.lane.b32.xlu0 %v771, 112
    %v1017 = vpop.permute.xlu0 %1016
    %1018 = vrot.lane.b32.xlu0 %v768, 112
    %v1019 = vpop.permute.xlu0 %1018
    %1020 = vrot.lane.b32.xlu0 %v772, 112
    %v1021 = vpop.permute.xlu0 %1020
    %1022 = vrot.lane.b32.xlu0 %v769, 112
    %v1023 = vpop.permute.xlu0 %1022
    %1024 = vrot.lane.b32.xlu0 %v773, 112
    %v1025 = vpop.permute.xlu0 %1024
    %v1026 = vsel %vm469, %v1019, %v1023
    %v1027 = vsel %vm469, %v1021, %v1025
    %v1028 = vsel %vm469, %v1015, %v1019
    %v1029 = vsel %vm469, %v1017, %v1021
    %v1030 = vsel %vm469, %v1011, %v1015
    %v1031 = vsel %vm469, %v1013, %v1017
    %v1032 = vsel %vm469, %v1023, %v1011
    %v1033 = vsel %vm469, %v1025, %v1013
    %v1034 = vpack.c.bf16 %v1031, %v1030
    %v1035 = vpack.c.bf16 %v1029, %v1028
    %v1036 = vpack.c.bf16 %v1027, %v1026
    %v1037 = vpack.c.bf16 %v1033, %v1032
    %v1038 = vmul.bf16 %v1034, %v155
    %v1039 = vmul.bf16 %v1035, %v156
    %v1040 = vmul.bf16 %v1036, %v157
    %v1041 = vmul.bf16 %v1037, %v158
    %1042 = vst [vmem:[#allocation2 + $0xe0] sm:$0xff] %v1038
    %1043 = vst [vmem:[#allocation2 + $0xe8] sm:$0xff] %v1039
    %1044 = vst [vmem:[#allocation2 + $0xf0] sm:$0xff] %v1040
    %1045 = vst [vmem:[#allocation2 + $0xf8] sm:$0xff] %v1041
    %1046 = vrot.lane.b32.xlu0 %v766, 111
    %v1047 = vpop.permute.xlu0 %1046
    %1048 = vrot.lane.b32.xlu0 %v770, 111
    %v1049 = vpop.permute.xlu0 %1048
    %1050 = vrot.lane.b32.xlu0 %v767, 111
    %v1051 = vpop.permute.xlu0 %1050
    %1052 = vrot.lane.b32.xlu0 %v771, 111
    %v1053 = vpop.permute.xlu0 %1052
    %1054 = vrot.lane.b32.xlu0 %v768, 111
    %v1055 = vpop.permute.xlu0 %1054
    %1056 = vrot.lane.b32.xlu0 %v772, 111
    %v1057 = vpop.permute.xlu0 %1056
    %1058 = vrot.lane.b32.xlu0 %v769, 111
    %v1059 = vpop.permute.xlu0 %1058
    %1060 = vrot.lane.b32.xlu0 %v773, 111
    %v1061 = vpop.permute.xlu0 %1060
    %v1062 = vsel %vm506, %v1055, %v1059
    %v1063 = vsel %vm506, %v1057, %v1061
    %v1064 = vsel %vm506, %v1051, %v1055
    %v1065 = vsel %vm506, %v1053, %v1057
    %v1066 = vsel %vm506, %v1047, %v1051
    %v1067 = vsel %vm506, %v1049, %v1053
    %v1068 = vsel %vm506, %v1059, %v1047
    %v1069 = vsel %vm506, %v1061, %v1049
    %v1070 = vpack.c.bf16 %v1067, %v1066
    %v1071 = vpack.c.bf16 %v1065, %v1064
    %v1072 = vpack.c.bf16 %v1063, %v1062
    %v1073 = vpack.c.bf16 %v1069, %v1068
    %v1074 = vmul.bf16 %v1070, %v155
    %v1075 = vmul.bf16 %v1071, %v156
    %v1076 = vmul.bf16 %v1072, %v157
    %v1077 = vmul.bf16 %v1073, %v158
    %v1078 = vmul.bf16 %v1074, %v179
    %v1079 = vmul.bf16 %v1075, %v180
    %v1080 = vmul.bf16 %v1076, %v181
    %v1081 = vmul.bf16 %v1077, %v182
    %1082 = vst [vmem:[#allocation2 + $0x100] sm:$0xff] %v1078
    %1083 = vst [vmem:[#allocation2 + $0x108] sm:$0xff] %v1079
    %1084 = vst [vmem:[#allocation2 + $0x110] sm:$0xff] %v1080
    %1085 = vst [vmem:[#allocation2 + $0x118] sm:$0xff] %v1081
    %v1086 = vld [vmem:[%s5] sm:$0xff]
    %v1087 = vld [vmem:[#allocation2] sm:$0xff]
    %v1088 = vld [vmem:[#allocation2 + $0x8] sm:$0xff]
    %v1089 = vld [vmem:[#allocation2 + $0x10] sm:$0xff]
    %v1090 = vld [vmem:[#allocation2 + $0x18] sm:$0xff]
    %v1091 = vld [vmem:[#allocation2 + $0x20] sm:$0xff]
    %v1092 = vld [vmem:[#allocation2 + $0x28] sm:$0xff]
    %v1093 = vld [vmem:[#allocation2 + $0x30] sm:$0xff]
    %v1094 = vld [vmem:[#allocation2 + $0x38] sm:$0xff]
    %v1095 = vld [vmem:[#allocation2 + $0x40] sm:$0xff]
    %v1096 = vld [vmem:[#allocation2 + $0x48] sm:$0xff]
    %v1097 = vld [vmem:[#allocation2 + $0x50] sm:$0xff]
    %v1098 = vld [vmem:[#allocation2 + $0x58] sm:$0xff]
    %v1099 = vld [vmem:[#allocation2 + $0x60] sm:$0xff]
    %v1100 = vld [vmem:[#allocation2 + $0x68] sm:$0xff]
    %v1101 = vld [vmem:[#allocation2 + $0x70] sm:$0xff]
    %v1102 = vld [vmem:[#allocation2 + $0x78] sm:$0xff]
    %v1103 = vld [vmem:[#allocation2 + $0x80] sm:$0xff]
    %v1104 = vld [vmem:[#allocation2 + $0x88] sm:$0xff]
    %v1105 = vld [vmem:[#allocation2 + $0x90] sm:$0xff]
    %v1106 = vld [vmem:[#allocation2 + $0x98] sm:$0xff]
    %v1107 = vld [vmem:[#allocation2 + $0xa0] sm:$0xff]
    %v1108 = vld [vmem:[#allocation2 + $0xa8] sm:$0xff]
    %v1109 = vld [vmem:[#allocation2 + $0xb0] sm:$0xff]
    %v1110 = vld [vmem:[#allocation2 + $0xb8] sm:$0xff]
    %v1111 = vld [vmem:[#allocation2 + $0xc0] sm:$0xff]
    %v1112 = vld [vmem:[#allocation2 + $0xc8] sm:$0xff]
    %v1113 = vld [vmem:[#allocation2 + $0xd0] sm:$0xff]
    %v1114 = vld [vmem:[#allocation2 + $0xd8] sm:$0xff]
    %v1115 = vld [vmem:[#allocation2 + $0xe0] sm:$0xff]
    %v1116 = vld [vmem:[#allocation2 + $0xe8] sm:$0xff]
    %v1117 = vld [vmem:[#allocation2 + $0xf0] sm:$0xff]
    %v1118 = vld [vmem:[#allocation2 + $0xf8] sm:$0xff]
    %v1119 = vld [vmem:[#allocation2 + $0x100] sm:$0xff]
    %v1120 = vld [vmem:[#allocation2 + $0x108] sm:$0xff]
    %v1121 = vld [vmem:[#allocation2 + $0x110] sm:$0xff]
    %v1122 = vld [vmem:[#allocation2 + $0x118] sm:$0xff]
    %v1123 = vld [vmem:[%s6] sm:$0xff]
    %1125 = vset.pattern.permute.xlu0 0
    %1126 = vperm.xlu0 %1125, %v1123
    %v1127 = vpop.permute.xlu0 %1126
    %v1130 = vunpack.c.l.b16 %v1086
    %v1131 = vunpack.c.h.b16 %v1086
    %v1132 = vpack.c.b16 %v1130, %v1130
    %v1133 = vpack.c.b16 %v1131, %v1131
    %v1136 = vsel %vm590, %v1133, 0
    %1138 = vmatprep.subr.bf16.mxu0 %v1088
    %1139 = vmatpush1.bf16.msra.mxu0 %v1087
    %1140 = vmatprep.subr.bf16.mxu0 %v1092
    %1141 = vmatpush1.bf16.msra.mxu0 %v1091
    %1142 = vmatprep.subr.bf16.mxu0 %v1096
    %1143 = vmatpush1.bf16.msra.mxu0 %v1095
    %1144 = vmatprep.subr.bf16.mxu0 %v1100
    %1145 = vmatpush1.bf16.msra.mxu0 %v1099
    %1146 = vmatprep.subr.bf16.mxu0 %v1104
    %1147 = vmatpush1.bf16.msra.mxu0 %v1103
    %1148 = vmatprep.subr.bf16.mxu0 %v1108
    %1149 = vmatpush1.bf16.msra.mxu0 %v1107
    %1150 = vmatprep.subr.bf16.mxu0 %v1112
    %1151 = vmatpush1.bf16.msra.mxu0 %v1111
    %1152 = vmatprep.subr.bf16.mxu0 %v1116
    %1153 = vmatpush1.bf16.msra.mxu0 %v1115
    %1154 = vmatprep.subr.bf16.mxu0 %v1120
    %1155 = vmatpush1.bf16.msra.mxu0 %v1119
    %1156 = vmatprep.subr.bf16.mxu0 0
    %1157 = vmatpush1.bf16.msra.mxu0 0
    %1158 = vmatprep.subr.bf16.mxu0 0
    %1159 = vmatpush1.bf16.msra.mxu0 0
    %1160 = vmatprep.subr.bf16.mxu0 0
    %1161 = vmatpush1.bf16.msra.mxu0 0
    %1162 = vmatprep.subr.bf16.mxu0 0
    %1163 = vmatpush1.bf16.msra.mxu0 0
    %1164 = vmatprep.subr.bf16.mxu0 0
    %1165 = vmatpush1.bf16.msra.mxu0 0
    %1166 = vmatprep.subr.bf16.mxu0 0
    %1167 = vmatpush1.bf16.msra.mxu0 0
    %1168 = vmatprep.subr.bf16.mxu0 0
    %1169 = vmatpush1.bf16.msra.mxu0 0
    %1170 = vmatprep.mubr.bf16.mxu0 %v1136
    %1171 = vmatmul.mubr.bf16.gmra.mrb[0].mxu0 %v1132
    %v1172 = vpop.f32.mrb[0].mxu0
    %v1173 = vadd.f32 %v1127, %v1172
    %v1174 = vpop.f32.mrb[0].mxu0
    %v1175 = vadd.f32 %v1127, %v1174
    %v1176 = vpop.f32.mrb[0].mxu0
    %v1177 = vpop.f32.mrb[0].mxu0
    %1178 = vdwg.mxu0
    %1179 = vmatprep.subr.bf16.mxu0 %v1090
    %1180 = vmatpush1.bf16.msra.mxu0 %v1089
    %1181 = vmatprep.subr.bf16.mxu0 %v1094
    %1182 = vmatpush1.bf16.msra.mxu0 %v1093
    %1183 = vmatprep.subr.bf16.mxu0 %v1098
    %1184 = vmatpush1.bf16.msra.mxu0 %v1097
    %1185 = vmatprep.subr.bf16.mxu0 %v1102
    %1186 = vmatpush1.bf16.msra.mxu0 %v1101
    %1187 = vmatprep.subr.bf16.mxu0 %v1106
    %1188 = vmatpush1.bf16.msra.mxu0 %v1105
    %1189 = vmatprep.subr.bf16.mxu0 %v1110
    %1190 = vmatpush1.bf16.msra.mxu0 %v1109
    %1191 = vmatprep.subr.bf16.mxu0 %v1114
    %1192 = vmatpush1.bf16.msra.mxu0 %v1113
    %1193 = vmatprep.subr.bf16.mxu0 %v1118
    %1194 = vmatpush1.bf16.msra.mxu0 %v1117
    %1195 = vmatprep.subr.bf16.mxu0 %v1122
    %1196 = vmatpush1.bf16.msra.mxu0 %v1121
    %1197 = vmatprep.subr.bf16.mxu0 0
    %1198 = vmatpush1.bf16.msra.mxu0 0
    %1199 = vmatprep.subr.bf16.mxu0 0
    %1200 = vmatpush1.bf16.msra.mxu0 0
    %1201 = vmatprep.subr.bf16.mxu0 0
    %1202 = vmatpush1.bf16.msra.mxu0 0
    %1203 = vmatprep.subr.bf16.mxu0 0
    %1204 = vmatpush1.bf16.msra.mxu0 0
    %1205 = vmatprep.subr.bf16.mxu0 0
    %1206 = vmatpush1.bf16.msra.mxu0 0
    %1207 = vmatprep.subr.bf16.mxu0 0
    %1208 = vmatpush1.bf16.msra.mxu0 0
    %1209 = vmatprep.subr.bf16.mxu0 0
    %1210 = vmatpush1.bf16.msra.mxu0 0
    %1211 = vmatprep.mubr.bf16.mxu0 %v1136
    %1212 = vmatmul.mubr.bf16.gmra.mrb[0].mxu0 %v1132
    %v1213 = vpop.f32.mrb[0].mxu0
    %v1214 = vadd.f32 %v1127, %v1213
    %v1215 = vpop.f32.mrb[0].mxu0
    %v1216 = vadd.f32 %v1127, %v1215
    %v1217 = vpop.f32.mrb[0].mxu0
    %v1218 = vpop.f32.mrb[0].mxu0
    %1219 = vdwg.mxu0
    %v1220 = vmax.f32 %v1173, 0.0
    %v1221 = vmax.f32 %v1175, 0.0
    %v1222 = vmax.f32 %v1214, 0.0
    %v1223 = vmax.f32 %v1216, 0.0
    %v1224 = vadd.f32 %v1220, %v1221
    %v1225 = vadd.f32 %v1224, %v1222
    %v1226 = vadd.f32 %v1225, %v1223
    %1227 = vadd.xlane.f32.xlu0 %v1226
    %v1228 = vpop.xlane.xlu0 %1227
    %v1229 = vmul.f32 %v1228, 0.001953125
    %v1230 = vsub.f32 %v1220, %v1229
    %v1231 = vsub.f32 %v1221, %v1229
    %v1232 = vsub.f32 %v1222, %v1229
    %v1233 = vsub.f32 %v1223, %v1229
    %v1234 = vmul.f32 %v1230, %v1230
    %v1235 = vmul.f32 %v1231, %v1231
    %v1236 = vmul.f32 %v1232, %v1232
    %v1237 = vmul.f32 %v1233, %v1233
    %v1238 = vadd.f32 %v1234, %v1235
    %v1239 = vadd.f32 %v1238, %v1236
    %v1240 = vadd.f32 %v1239, %v1237
    %1241 = vadd.xlane.f32.xlu0 %v1240
    %v1242 = vpop.xlane.xlu0 %1241
    %v1243 = vmul.f32 %v1242, 0.001953125
    %v1244 = vld [vmem:[%s7] sm:$0xff]
    %v1245 = vadd.f32 %v1243, 1e-05
    %v1246 = vrsqrt.pop %v1245
    %v1247 = vmul.f32 %v1244, %v1246
    %1249 = vset.pattern.permute.xlu0 0
    %1250 = vperm.xlu0 %1249, %v1247
    %v1251 = vpop.permute.xlu0 %1250
    %v1253 = vmul.f32 %v1230, %v1251
    %v1254 = vmul.f32 %v1231, %v1251
    %v1255 = vmul.f32 %v1232, %v1251
    %v1256 = vmul.f32 %v1233, %v1251
    %v1257 = vld [vmem:[%s8] sm:$0xff]
    %1259 = vset.pattern.permute.xlu0 0
    %1260 = vperm.xlu0 %1259, %v1257
    %v1261 = vpop.permute.xlu0 %1260
    %v1263 = vadd.f32 %v1253, %v1261
    %v1264 = vadd.f32 %v1254, %v1261
    %v1265 = vadd.f32 %v1255, %v1261
    %v1266 = vadd.f32 %v1256, %v1261
    %1267 = vst [vmem:[#allocation3] sm:$0xff] %v1263
    %1268 = vst [vmem:[#allocation3 + $0x8] sm:$0xff] %v1264
    %1269 = vst [vmem:[#allocation3 + $0x10] sm:$0xff] %v1265
    %1270 = vst [vmem:[#allocation3 + $0x18] sm:$0xff] %v1266
    // Predicated region
    $region38: #{tpu_custom_call.1} parent=1 // pred_check
      _
    $region39: #{tpu_custom_call.1} parent=1 // pred_check_branch
      %1272 = sbr.rel (0) target = $region41
    $region40: #{tpu_custom_call.1} parent=1 // pred_region
      %s1274 = ssub.s32 512, 512
      %1275 = vsyncadd [#allocation4], %s1274
      %s1277 = sshll.u32 [#allocation3], 4
      %s1278 = int_to_ptr.vmem [resolvable:$true] %s1277
      %1280 = dma.vmem_to_hbm [thread:$0]  %s1278, 512, %s9, [#allocation4]
    $region41: #{tpu_custom_call.1} parent=1 // pred_fallthru
      _
    // Predicated region
    $region42: #{tpu_custom_call.1} parent=1 // pred_check
      _
    $region43: #{tpu_custom_call.1} parent=1 // pred_check_branch
      %1282 = sbr.rel (0) target = $region45
    $region44: #{tpu_custom_call.1} parent=1 // pred_region
      %1283 = dma.done [#allocation4], 512
    $region45: #{tpu_custom_call.1} parent=1 // pred_fallthru
      _
    %1284 = vsyncpa [#allocation4], 1

</llo_original>
